<compile_context>
chip_gen: v6e
topology: v6e:2x2x1
jax: 0.10.0
libtpu: 0.0.40
codegen_flags: <defaults>
</compile_context>

<pallas_src>
import functools
import math

import jax
import jax.numpy as jnp
from jax import lax
from jax.experimental import pallas as pl
from jax.experimental.pallas import tpu as pltpu


_MASK_VALUE = -1e30  # large finite negative: exp() underflows to 0, no NaN risk


def _vmem_limit_bytes():
    """~75% of physical VMEM: ~96 MiB on v5e/v6e, ~48 MiB on v7x."""
    cap = 128 * 1024 * 1024
    try:
        info = pltpu.get_tpu_info()
        cap = int(getattr(info, "vmem_capacity_bytes", cap) or cap)
    except Exception:
        pass
    return int(cap * 3 // 4)


def mha_kernel(x_ref, wqkv_ref, bqkv_ref, wo_ref, bo_ref, o_ref, stage_ref, *,
               n_heads, head_dim, kv_tile, scale, use_bf16):
    S = x_ref.shape[0]
    D = n_heads * head_dim
    cdt = jnp.bfloat16 if use_bf16 else jnp.float32   # MXU input dtype

    x = x_ref[...].astype(cdt)                        # (S, D)

    # Fused QKV projection: one lane-dense (S, D) @ (D, 3D) MXU matmul, f32 acc.
    qkv = jnp.dot(x, wqkv_ref[...], preferred_element_type=jnp.float32)
    qkv = qkv + bqkv_ref[...]                         # (S, 3D) f32

    q_all = qkv[:, 0:D] * scale       # fold 1/sqrt(hd) into q, not the (S,S) scores
    k_all = qkv[:, D:2 * D]
    v_all = qkv[:, 2 * D:3 * D]

    n_chunks = S // kv_tile
    row_ids = lax.broadcasted_iota(jnp.int32, (S, kv_tile), 0)   # query index

    for t in range(n_heads):                          # static unroll over heads
        lo, hi = t * head_dim, (t + 1) * head_dim
        q_t = q_all[:, lo:hi].astype(cdt)             # (S, hd)

        m_i = jnp.full((S, 1), _MASK_VALUE, jnp.float32)
        l_i = jnp.zeros((S, 1), jnp.float32)
        acc = jnp.zeros((S, head_dim), jnp.float32)

        # Flash-style online softmax over kv chunks: (S, S) scores never materialize.
        for j in range(n_chunks):                     # static unroll (S known at trace)
            k_j = k_all[j * kv_tile:(j + 1) * kv_tile, lo:hi].astype(cdt)
            v_j = v_all[j * kv_tile:(j + 1) * kv_tile, lo:hi].astype(cdt)

            # s[i, c] = q_i . k_{j*Tk + c} — contract last dims (no transposed k tile).
            s = lax.dot_general(q_t, k_j,
                                dimension_numbers=(((1,), (1,)), ((), ())),
                                preferred_element_type=jnp.float32)   # (S, Tk) f32

            # In-kernel causal mask via iota compares (no DMA'd (S, S) bias input).
            col_ids = lax.broadcasted_iota(jnp.int32, (S, kv_tile), 1) + j * kv_tile
            s = jnp.where(col_ids > row_ids, jnp.float32(_MASK_VALUE), s)

            m_new = jnp.maximum(m_i, jnp.max(s, axis=-1, keepdims=True))
            alpha = jnp.exp(m_i - m_new)
            p = jnp.exp(s - m_new)
            l_i = alpha * l_i + jnp.sum(p, axis=-1, keepdims=True)
            acc = alpha * acc + jnp.dot(p.astype(cdt), v_j,
                                        preferred_element_type=jnp.float32)
            m_i = m_new

        head_out = acc * pl.reciprocal(l_i, approx=use_bf16)     # (S, hd) f32
        stage_ref[:, lo:hi] = head_out    # lane columns of the resident staging buffer

    # Single full-depth output projection: (S, D) @ (D, D) + bias.
    out = jnp.dot(stage_ref[...].astype(cdt), wo_ref[...],
                  preferred_element_type=jnp.float32) + bo_ref[...]
    o_ref[...] = out.astype(o_ref.dtype)


def multi_head_attention(x, wq, bq, wk, bk, wv, bv, wo, bo, *, n_heads,
                         use_bf16=True, kv_tile=512):
    """x: (B, S, D); weights (D, D) in (in, out) layout; biases (1, D)."""
    B, S, D = x.shape
    hd = D // n_heads
    assert n_heads * hd == D
    out_dtype = x.dtype

    # kv chunk width: largest divisor of S not exceeding kv_tile.
    tk = max(1, min(S, kv_tile))
    while S % tk != 0:
        tk -= 1

    wdt = jnp.bfloat16 if use_bf16 else jnp.float32

    # One-time XLA-side layout plumbing: fused QKV slab, bf16 weights on fast path.
    wqkv = jnp.concatenate([wq, wk, wv], axis=1).astype(wdt)          # (D, 3D)
    bqkv = jnp.concatenate([bq, bk, bv], axis=1).astype(jnp.float32)  # (1, 3D)
    wo_c = wo.astype(wdt)                                             # (D, D)
    bo_c = bo.astype(jnp.float32)                                     # (1, D)
    x_in = x.astype(wdt) if use_bf16 else x

    kernel = functools.partial(mha_kernel, n_heads=n_heads, head_dim=hd,
                               kv_tile=tk, scale=1.0 / math.sqrt(hd),
                               use_bf16=use_bf16)

    wbytes = 2 if use_bf16 else 4
    flops = B * (8 * S * D * D + 4 * S * S * D)
    cost = pl.CostEstimate(
        flops=flops,
        transcendentals=B * n_heads * S * (S + S // tk),
        bytes_accessed=(x_in.dtype.itemsize * B * S * D + 4 * B * S * D
                        + wbytes * 4 * D * D + 4 * 4 * D))

    # TODO(synk): for very large S*D, add a query-row "parallel" grid axis (better
    # v7x megacore balance at B=1/odd B) and q-tile the projections so the per-step
    # working set stays inside the scoped VMEM limit.
    return pl.pallas_call(
        kernel,
        out_shape=jax.ShapeDtypeStruct((B, S, D), out_dtype),
        grid=(B,),
        in_specs=[
            pl.BlockSpec((None, S, D), lambda b: (b, 0, 0)),    # x (per batch)
            pl.BlockSpec((D, 3 * D), lambda b: (0, 0)),         # fused QKV weights (once)
            pl.BlockSpec((1, 3 * D), lambda b: (0, 0)),         # fused QKV bias
            pl.BlockSpec((D, D), lambda b: (0, 0)),             # fc_out weight (once)
            pl.BlockSpec((1, D), lambda b: (0, 0)),             # fc_out bias
        ],
        out_specs=pl.BlockSpec((None, S, D), lambda b: (b, 0, 0)),
        scratch_shapes=[pltpu.VMEM((S, D), jnp.float32)],       # head-output staging
        compiler_params=pltpu.CompilerParams(
            dimension_semantics=("parallel",),
            vmem_limit_bytes=_vmem_limit_bytes()),
        cost_estimate=cost,
    )(x_in, wqkv, bqkv, wo_c, bo_c)


def _reference(x, wq, bq, wk, bk, wv, bv, wo, bo, n_heads):
    """Pure-JAX reference matching the PyTorch forward (dropout in eval)."""
    B, S, D = x.shape
    hd = D // n_heads
    q = (x @ wq + bq).reshape(B, S, n_heads, hd).transpose(0, 2, 1, 3)
    k = (x @ wk + bk).reshape(B, S, n_heads, hd).transpose(0, 2, 1, 3)
    v = (x @ wv + bv).reshape(B, S, n_heads, hd).transpose(0, 2, 1, 3)
    scores = jnp.einsum("bhqd,bhkd->bhqk", q, k) / math.sqrt(hd)
    mask = jnp.triu(jnp.ones((S, S), bool), k=1)
    scores = jnp.where(mask, -jnp.inf, scores)
    p = jax.nn.softmax(scores, axis=-1)
    out = jnp.einsum("bhqk,bhkd->bhqd", p, v)
    out = out.transpose(0, 2, 1, 3).reshape(B, S, D)
    return out @ wo + bo


if __name__ == "__main__":
    B, S, D = 2, 8, 32
    n_heads = 4

    key = jax.random.PRNGKey(0)
    keys = jax.random.split(key, 9)

    # Deterministic parameter init (PyTorch Linear-style uniform(-1/sqrt(D), 1/sqrt(D))).
    bound = 1.0 / math.sqrt(D)
    def init_w(k):
        return jax.random.uniform(k, (D, D), jnp.float32, -bound, bound)
    def init_b(k):
        return jax.random.uniform(k, (1, D), jnp.float32, -bound, bound)

    wq, wk, wv, wo = init_w(keys[0]), init_w(keys[1]), init_w(keys[2]), init_w(keys[3])
    bq, bk, bv, bo = init_b(keys[4]), init_b(keys[5]), init_b(keys[6]), init_b(keys[7])

    x = jax.random.normal(keys[8], (B, S, D), jnp.float32)

    ref = _reference(x, wq, bq, wk, bk, wv, bv, wo, bo, n_heads)

    # Full-precision path (f32 MXU inputs, exact reciprocal): tight check.
    out_f32 = multi_head_attention(x, wq, bq, wk, bk, wv, bv, wo, bo,
                                   n_heads=n_heads, use_bf16=False)
    out_f32 = jax.block_until_ready(out_f32)
    assert out_f32.shape == (B, S, D)
    assert jnp.allclose(out_f32, ref, atol=5e-4, rtol=5e-4), "f32 path mismatch"

    # Fast path (bf16 x/weights, f32 accumulation, approx EUP reciprocal).
    out_fast = multi_head_attention(x, wq, bq, wk, bk, wv, bv, wo, bo,
                                    n_heads=n_heads, use_bf16=True)
    out_fast = jax.block_until_ready(out_fast)
    assert out_fast.shape == (B, S, D)
    assert jnp.allclose(out_fast, ref, atol=5e-2, rtol=5e-2), "bf16 path mismatch"

    print("KERNEL_OK")
</pallas_src>

<mosaic_0001>
module attributes {stable_mosaic.version = 11 : i64} {
  func.func @mha_kernel(%arg0: i32, %arg1: memref<1x8x32xf32, #tpu.memory_space<vmem>>, %arg2: memref<32x96xf32, #tpu.memory_space<vmem>>, %arg3: memref<1x96xf32, #tpu.memory_space<vmem>>, %arg4: memref<32x32xf32, #tpu.memory_space<vmem>>, %arg5: memref<1x32xf32, #tpu.memory_space<vmem>>, %arg6: memref<1x8x32xf32, #tpu.memory_space<vmem>>, %arg7: memref<8x32xf32, #tpu.memory_space<vmem>>) attributes {dimension_semantics = [#tpu.dimension_semantics<parallel>], iteration_bounds = array<i64: 2>, scalar_prefetch = 0 : i64, scratch_operands = 1 : i64, tpu.core_type = #tpu.core_type<tc>, window_params = [{transform_indices = @transform_0, window_bounds = array<i64: 1, 8, 32>}, {pipeline_mode = #tpu.pipeline_mode<synchronous>, transform_indices = @transform_1, window_bounds = array<i64: 32, 96>}, {pipeline_mode = #tpu.pipeline_mode<synchronous>, transform_indices = @transform_2, window_bounds = array<i64: 1, 96>}, {pipeline_mode = #tpu.pipeline_mode<synchronous>, transform_indices = @transform_3, window_bounds = array<i64: 32, 32>}, {pipeline_mode = #tpu.pipeline_mode<synchronous>, transform_indices = @transform_4, window_bounds = array<i64: 1, 32>}, {transform_indices = @transform_5, window_bounds = array<i64: 1, 8, 32>}]} {
    %c0 = arith.constant 0 : index
    %c0_0 = arith.constant 0 : index
    %c0_1 = arith.constant 0 : index
    %0 = vector.load %arg1[%c0, %c0_0, %c0_1] : memref<1x8x32xf32, #tpu.memory_space<vmem>>, vector<1x8x32xf32>
    %1 = vector.shape_cast %0 : vector<1x8x32xf32> to vector<8x32xf32>
    %c0_2 = arith.constant 0 : index
    %c0_3 = arith.constant 0 : index
    %2 = vector.load %arg2[%c0_2, %c0_3] : memref<32x96xf32, #tpu.memory_space<vmem>>, vector<32x96xf32>
    %cst = arith.constant dense<0.000000e+00> : vector<8x96xf32>
    %3 = tpu.matmul %1, %2, %cst {dimension_numbers = #tpu.dot_dimension_numbers<[1], [0], [0], [1], [0, 0, 1, 1], [], []>} : vector<8x32xf32>, vector<32x96xf32>, vector<8x96xf32> -> vector<8x96xf32>
    %c0_4 = arith.constant 0 : index
    %c0_5 = arith.constant 0 : index
    %4 = vector.load %arg3[%c0_4, %c0_5] : memref<1x96xf32, #tpu.memory_space<vmem>>, vector<1x96xf32>
    %5 = vector.broadcast %4 : vector<1x96xf32> to vector<8x96xf32>
    %6 = arith.addf %3, %5 : vector<8x96xf32>
    %7 = vector.extract_strided_slice %6 {offsets = [0, 0], sizes = [8, 32], strides = [1, 1]} : vector<8x96xf32> to vector<8x32xf32>
    %cst_6 = arith.constant 0.353553385 : f32
    %8 = vector.broadcast %cst_6 : f32 to vector<8x32xf32>
    %9 = arith.mulf %7, %8 : vector<8x32xf32>
    %10 = vector.extract_strided_slice %6 {offsets = [0, 32], sizes = [8, 32], strides = [1, 1]} : vector<8x96xf32> to vector<8x32xf32>
    %11 = vector.extract_strided_slice %6 {offsets = [0, 64], sizes = [8, 32], strides = [1, 1]} : vector<8x96xf32> to vector<8x32xf32>
    %12 = tpu.iota {dimensions = array<i32: 0>} : vector<8x8xi32>
    %13 = vector.extract_strided_slice %9 {offsets = [0, 0], sizes = [8, 8], strides = [1, 1]} : vector<8x32xf32> to vector<8x8xf32>
    %cst_7 = arith.constant -1.000000e+30 : f32
    %14 = vector.broadcast %cst_7 : f32 to vector<8x1xf32>
    %cst_8 = arith.constant 0.000000e+00 : f32
    %15 = vector.broadcast %cst_8 : f32 to vector<8x1xf32>
    %cst_9 = arith.constant 0.000000e+00 : f32
    %16 = vector.broadcast %cst_9 : f32 to vector<8x8xf32>
    %17 = vector.extract_strided_slice %10 {offsets = [0, 0], sizes = [8, 8], strides = [1, 1]} : vector<8x32xf32> to vector<8x8xf32>
    %18 = vector.extract_strided_slice %11 {offsets = [0, 0], sizes = [8, 8], strides = [1, 1]} : vector<8x32xf32> to vector<8x8xf32>
    %cst_10 = arith.constant dense<0.000000e+00> : vector<8x8xf32>
    %19 = tpu.matmul %13, %17, %cst_10 {dimension_numbers = #tpu.dot_dimension_numbers<[1], [1], [0], [0], [0, 0, 1, 0], [], []>} : vector<8x8xf32>, vector<8x8xf32>, vector<8x8xf32> -> vector<8x8xf32>
    %20 = tpu.iota {dimensions = array<i32: 1>} : vector<8x8xi32>
    %c0_i32 = arith.constant 0 : i32
    %21 = vector.broadcast %c0_i32 : i32 to vector<8x8xi32>
    %22 = arith.addi %20, %21 : vector<8x8xi32>
    %23 = arith.cmpi sgt, %22, %12 : vector<8x8xi32>
    %cst_11 = arith.constant -1.000000e+30 : f32
    %24 = vector.broadcast %cst_11 : f32 to vector<8x8xf32>
    %25 = arith.select %23, %24, %19 : vector<8x8xi1>, vector<8x8xf32>
    %cst_12 = arith.constant dense<0xFF800000> : vector<8xf32>
    %26 = vector.multi_reduction <maximumf>, %25, %cst_12 [1] : vector<8x8xf32> to vector<8xf32>
    %27 = vector.shape_cast %26 : vector<8xf32> to vector<8x1xf32>
    %28 = arith.maximumf %14, %27 : vector<8x1xf32>
    %29 = arith.subf %14, %28 : vector<8x1xf32>
    %30 = math.exp %29 : vector<8x1xf32>
    %31 = vector.broadcast %28 : vector<8x1xf32> to vector<8x8xf32>
    %32 = arith.subf %25, %31 : vector<8x8xf32>
    %33 = math.exp %32 : vector<8x8xf32>
    %34 = arith.mulf %30, %15 : vector<8x1xf32>
    %cst_13 = arith.constant dense<0.000000e+00> : vector<8xf32>
    %35 = vector.multi_reduction <add>, %33, %cst_13 [1] : vector<8x8xf32> to vector<8xf32>
    %36 = vector.shape_cast %35 : vector<8xf32> to vector<8x1xf32>
    %37 = arith.addf %34, %36 : vector<8x1xf32>
    %38 = vector.broadcast %30 : vector<8x1xf32> to vector<8x8xf32>
    %39 = arith.mulf %38, %16 : vector<8x8xf32>
    %cst_14 = arith.constant dense<0.000000e+00> : vector<8x8xf32>
    %40 = tpu.matmul %33, %18, %cst_14 {dimension_numbers = #tpu.dot_dimension_numbers<[1], [0], [0], [1], [0, 0, 1, 1], [], []>} : vector<8x8xf32>, vector<8x8xf32>, vector<8x8xf32> -> vector<8x8xf32>
    %41 = arith.addf %39, %40 : vector<8x8xf32>
    %42 = tpu.reciprocal %37 : vector<8x1xf32> -> vector<8x1xf32>
    %43 = vector.broadcast %42 : vector<8x1xf32> to vector<8x8xf32>
    %44 = arith.mulf %41, %43 : vector<8x8xf32>
    %c0_15 = arith.constant 0 : index
    %c0_16 = arith.constant 0 : index
    %45 = vector.load %arg7[%c0_15, %c0_16] : memref<8x32xf32, #tpu.memory_space<vmem>>, vector<8x8xf32>
    tpu.vector_store %arg7[%c0_15, %c0_16], %44 {strides = array<i32>} : memref<8x32xf32, #tpu.memory_space<vmem>>, vector<8x8xf32>,
    %46 = vector.extract_strided_slice %9 {offsets = [0, 8], sizes = [8, 8], strides = [1, 1]} : vector<8x32xf32> to vector<8x8xf32>
    %cst_17 = arith.constant -1.000000e+30 : f32
    %47 = vector.broadcast %cst_17 : f32 to vector<8x1xf32>
    %cst_18 = arith.constant 0.000000e+00 : f32
    %48 = vector.broadcast %cst_18 : f32 to vector<8x1xf32>
    %cst_19 = arith.constant 0.000000e+00 : f32
    %49 = vector.broadcast %cst_19 : f32 to vector<8x8xf32>
    %50 = vector.extract_strided_slice %10 {offsets = [0, 8], sizes = [8, 8], strides = [1, 1]} : vector<8x32xf32> to vector<8x8xf32>
    %51 = vector.extract_strided_slice %11 {offsets = [0, 8], sizes = [8, 8], strides = [1, 1]} : vector<8x32xf32> to vector<8x8xf32>
    %cst_20 = arith.constant dense<0.000000e+00> : vector<8x8xf32>
    %52 = tpu.matmul %46, %50, %cst_20 {dimension_numbers = #tpu.dot_dimension_numbers<[1], [1], [0], [0], [0, 0, 1, 0], [], []>} : vector<8x8xf32>, vector<8x8xf32>, vector<8x8xf32> -> vector<8x8xf32>
    %53 = tpu.iota {dimensions = array<i32: 1>} : vector<8x8xi32>
    %c0_i32_21 = arith.constant 0 : i32
    %54 = vector.broadcast %c0_i32_21 : i32 to vector<8x8xi32>
    %55 = arith.addi %53, %54 : vector<8x8xi32>
    %56 = arith.cmpi sgt, %55, %12 : vector<8x8xi32>
    %cst_22 = arith.constant -1.000000e+30 : f32
    %57 = vector.broadcast %cst_22 : f32 to vector<8x8xf32>
    %58 = arith.select %56, %57, %52 : vector<8x8xi1>, vector<8x8xf32>
    %cst_23 = arith.constant dense<0xFF800000> : vector<8xf32>
    %59 = vector.multi_reduction <maximumf>, %58, %cst_23 [1] : vector<8x8xf32> to vector<8xf32>
    %60 = vector.shape_cast %59 : vector<8xf32> to vector<8x1xf32>
    %61 = arith.maximumf %47, %60 : vector<8x1xf32>
    %62 = arith.subf %47, %61 : vector<8x1xf32>
    %63 = math.exp %62 : vector<8x1xf32>
    %64 = vector.broadcast %61 : vector<8x1xf32> to vector<8x8xf32>
    %65 = arith.subf %58, %64 : vector<8x8xf32>
    %66 = math.exp %65 : vector<8x8xf32>
    %67 = arith.mulf %63, %48 : vector<8x1xf32>
    %cst_24 = arith.constant dense<0.000000e+00> : vector<8xf32>
    %68 = vector.multi_reduction <add>, %66, %cst_24 [1] : vector<8x8xf32> to vector<8xf32>
    %69 = vector.shape_cast %68 : vector<8xf32> to vector<8x1xf32>
    %70 = arith.addf %67, %69 : vector<8x1xf32>
    %71 = vector.broadcast %63 : vector<8x1xf32> to vector<8x8xf32>
    %72 = arith.mulf %71, %49 : vector<8x8xf32>
    %cst_25 = arith.constant dense<0.000000e+00> : vector<8x8xf32>
    %73 = tpu.matmul %66, %51, %cst_25 {dimension_numbers = #tpu.dot_dimension_numbers<[1], [0], [0], [1], [0, 0, 1, 1], [], []>} : vector<8x8xf32>, vector<8x8xf32>, vector<8x8xf32> -> vector<8x8xf32>
    %74 = arith.addf %72, %73 : vector<8x8xf32>
    %75 = tpu.reciprocal %70 : vector<8x1xf32> -> vector<8x1xf32>
    %76 = vector.broadcast %75 : vector<8x1xf32> to vector<8x8xf32>
    %77 = arith.mulf %74, %76 : vector<8x8xf32>
    %c0_26 = arith.constant 0 : index
    %c8 = arith.constant 8 : index
    %78 = vector.load %arg7[%c0_26, %c8] : memref<8x32xf32, #tpu.memory_space<vmem>>, vector<8x8xf32>
    tpu.vector_store %arg7[%c0_26, %c8], %77 {strides = array<i32>} : memref<8x32xf32, #tpu.memory_space<vmem>>, vector<8x8xf32>,
    %79 = vector.extract_strided_slice %9 {offsets = [0, 16], sizes = [8, 8], strides = [1, 1]} : vector<8x32xf32> to vector<8x8xf32>
    %cst_27 = arith.constant -1.000000e+30 : f32
    %80 = vector.broadcast %cst_27 : f32 to vector<8x1xf32>
    %cst_28 = arith.constant 0.000000e+00 : f32
    %81 = vector.broadcast %cst_28 : f32 to vector<8x1xf32>
    %cst_29 = arith.constant 0.000000e+00 : f32
    %82 = vector.broadcast %cst_29 : f32 to vector<8x8xf32>
    %83 = vector.extract_strided_slice %10 {offsets = [0, 16], sizes = [8, 8], strides = [1, 1]} : vector<8x32xf32> to vector<8x8xf32>
    %84 = vector.extract_strided_slice %11 {offsets = [0, 16], sizes = [8, 8], strides = [1, 1]} : vector<8x32xf32> to vector<8x8xf32>
    %cst_30 = arith.constant dense<0.000000e+00> : vector<8x8xf32>
    %85 = tpu.matmul %79, %83, %cst_30 {dimension_numbers = #tpu.dot_dimension_numbers<[1], [1], [0], [0], [0, 0, 1, 0], [], []>} : vector<8x8xf32>, vector<8x8xf32>, vector<8x8xf32> -> vector<8x8xf32>
    %86 = tpu.iota {dimensions = array<i32: 1>} : vector<8x8xi32>
    %c0_i32_31 = arith.constant 0 : i32
    %87 = vector.broadcast %c0_i32_31 : i32 to vector<8x8xi32>
    %88 = arith.addi %86, %87 : vector<8x8xi32>
    %89 = arith.cmpi sgt, %88, %12 : vector<8x8xi32>
    %cst_32 = arith.constant -1.000000e+30 : f32
    %90 = vector.broadcast %cst_32 : f32 to vector<8x8xf32>
    %91 = arith.select %89, %90, %85 : vector<8x8xi1>, vector<8x8xf32>
    %cst_33 = arith.constant dense<0xFF800000> : vector<8xf32>
    %92 = vector.multi_reduction <maximumf>, %91, %cst_33 [1] : vector<8x8xf32> to vector<8xf32>
    %93 = vector.shape_cast %92 : vector<8xf32> to vector<8x1xf32>
    %94 = arith.maximumf %80, %93 : vector<8x1xf32>
    %95 = arith.subf %80, %94 : vector<8x1xf32>
    %96 = math.exp %95 : vector<8x1xf32>
    %97 = vector.broadcast %94 : vector<8x1xf32> to vector<8x8xf32>
    %98 = arith.subf %91, %97 : vector<8x8xf32>
    %99 = math.exp %98 : vector<8x8xf32>
    %100 = arith.mulf %96, %81 : vector<8x1xf32>
    %cst_34 = arith.constant dense<0.000000e+00> : vector<8xf32>
    %101 = vector.multi_reduction <add>, %99, %cst_34 [1] : vector<8x8xf32> to vector<8xf32>
    %102 = vector.shape_cast %101 : vector<8xf32> to vector<8x1xf32>
    %103 = arith.addf %100, %102 : vector<8x1xf32>
    %104 = vector.broadcast %96 : vector<8x1xf32> to vector<8x8xf32>
    %105 = arith.mulf %104, %82 : vector<8x8xf32>
    %cst_35 = arith.constant dense<0.000000e+00> : vector<8x8xf32>
    %106 = tpu.matmul %99, %84, %cst_35 {dimension_numbers = #tpu.dot_dimension_numbers<[1], [0], [0], [1], [0, 0, 1, 1], [], []>} : vector<8x8xf32>, vector<8x8xf32>, vector<8x8xf32> -> vector<8x8xf32>
    %107 = arith.addf %105, %106 : vector<8x8xf32>
    %108 = tpu.reciprocal %103 : vector<8x1xf32> -> vector<8x1xf32>
    %109 = vector.broadcast %108 : vector<8x1xf32> to vector<8x8xf32>
    %110 = arith.mulf %107, %109 : vector<8x8xf32>
    %c0_36 = arith.constant 0 : index
    %c16 = arith.constant 16 : index
    %111 = vector.load %arg7[%c0_36, %c16] : memref<8x32xf32, #tpu.memory_space<vmem>>, vector<8x8xf32>
    tpu.vector_store %arg7[%c0_36, %c16], %110 {strides = array<i32>} : memref<8x32xf32, #tpu.memory_space<vmem>>, vector<8x8xf32>,
    %112 = vector.extract_strided_slice %9 {offsets = [0, 24], sizes = [8, 8], strides = [1, 1]} : vector<8x32xf32> to vector<8x8xf32>
    %cst_37 = arith.constant -1.000000e+30 : f32
    %113 = vector.broadcast %cst_37 : f32 to vector<8x1xf32>
    %cst_38 = arith.constant 0.000000e+00 : f32
    %114 = vector.broadcast %cst_38 : f32 to vector<8x1xf32>
    %cst_39 = arith.constant 0.000000e+00 : f32
    %115 = vector.broadcast %cst_39 : f32 to vector<8x8xf32>
    %116 = vector.extract_strided_slice %10 {offsets = [0, 24], sizes = [8, 8], strides = [1, 1]} : vector<8x32xf32> to vector<8x8xf32>
    %117 = vector.extract_strided_slice %11 {offsets = [0, 24], sizes = [8, 8], strides = [1, 1]} : vector<8x32xf32> to vector<8x8xf32>
    %cst_40 = arith.constant dense<0.000000e+00> : vector<8x8xf32>
    %118 = tpu.matmul %112, %116, %cst_40 {dimension_numbers = #tpu.dot_dimension_numbers<[1], [1], [0], [0], [0, 0, 1, 0], [], []>} : vector<8x8xf32>, vector<8x8xf32>, vector<8x8xf32> -> vector<8x8xf32>
    %119 = tpu.iota {dimensions = array<i32: 1>} : vector<8x8xi32>
    %c0_i32_41 = arith.constant 0 : i32
    %120 = vector.broadcast %c0_i32_41 : i32 to vector<8x8xi32>
    %121 = arith.addi %119, %120 : vector<8x8xi32>
    %122 = arith.cmpi sgt, %121, %12 : vector<8x8xi32>
    %cst_42 = arith.constant -1.000000e+30 : f32
    %123 = vector.broadcast %cst_42 : f32 to vector<8x8xf32>
    %124 = arith.select %122, %123, %118 : vector<8x8xi1>, vector<8x8xf32>
    %cst_43 = arith.constant dense<0xFF800000> : vector<8xf32>
    %125 = vector.multi_reduction <maximumf>, %124, %cst_43 [1] : vector<8x8xf32> to vector<8xf32>
    %126 = vector.shape_cast %125 : vector<8xf32> to vector<8x1xf32>
    %127 = arith.maximumf %113, %126 : vector<8x1xf32>
    %128 = arith.subf %113, %127 : vector<8x1xf32>
    %129 = math.exp %128 : vector<8x1xf32>
    %130 = vector.broadcast %127 : vector<8x1xf32> to vector<8x8xf32>
    %131 = arith.subf %124, %130 : vector<8x8xf32>
    %132 = math.exp %131 : vector<8x8xf32>
    %133 = arith.mulf %129, %114 : vector<8x1xf32>
    %cst_44 = arith.constant dense<0.000000e+00> : vector<8xf32>
    %134 = vector.multi_reduction <add>, %132, %cst_44 [1] : vector<8x8xf32> to vector<8xf32>
    %135 = vector.shape_cast %134 : vector<8xf32> to vector<8x1xf32>
    %136 = arith.addf %133, %135 : vector<8x1xf32>
    %137 = vector.broadcast %129 : vector<8x1xf32> to vector<8x8xf32>
    %138 = arith.mulf %137, %115 : vector<8x8xf32>
    %cst_45 = arith.constant dense<0.000000e+00> : vector<8x8xf32>
    %139 = tpu.matmul %132, %117, %cst_45 {dimension_numbers = #tpu.dot_dimension_numbers<[1], [0], [0], [1], [0, 0, 1, 1], [], []>} : vector<8x8xf32>, vector<8x8xf32>, vector<8x8xf32> -> vector<8x8xf32>
    %140 = arith.addf %138, %139 : vector<8x8xf32>
    %141 = tpu.reciprocal %136 : vector<8x1xf32> -> vector<8x1xf32>
    %142 = vector.broadcast %141 : vector<8x1xf32> to vector<8x8xf32>
    %143 = arith.mulf %140, %142 : vector<8x8xf32>
    %c0_46 = arith.constant 0 : index
    %c24 = arith.constant 24 : index
    %144 = vector.load %arg7[%c0_46, %c24] : memref<8x32xf32, #tpu.memory_space<vmem>>, vector<8x8xf32>
    tpu.vector_store %arg7[%c0_46, %c24], %143 {strides = array<i32>} : memref<8x32xf32, #tpu.memory_space<vmem>>, vector<8x8xf32>,
    %c0_47 = arith.constant 0 : index
    %c0_48 = arith.constant 0 : index
    %145 = vector.load %arg7[%c0_47, %c0_48] : memref<8x32xf32, #tpu.memory_space<vmem>>, vector<8x32xf32>
    %c0_49 = arith.constant 0 : index
    %c0_50 = arith.constant 0 : index
    %146 = vector.load %arg4[%c0_49, %c0_50] : memref<32x32xf32, #tpu.memory_space<vmem>>, vector<32x32xf32>
    %cst_51 = arith.constant dense<0.000000e+00> : vector<8x32xf32>
    %147 = tpu.matmul %145, %146, %cst_51 {dimension_numbers = #tpu.dot_dimension_numbers<[1], [0], [0], [1], [0, 0, 1, 1], [], []>} : vector<8x32xf32>, vector<32x32xf32>, vector<8x32xf32> -> vector<8x32xf32>
    %c0_52 = arith.constant 0 : index
    %c0_53 = arith.constant 0 : index
    %148 = vector.load %arg5[%c0_52, %c0_53] : memref<1x32xf32, #tpu.memory_space<vmem>>, vector<1x32xf32>
    %149 = vector.broadcast %148 : vector<1x32xf32> to vector<8x32xf32>
    %150 = arith.addf %147, %149 : vector<8x32xf32>
    %c0_54 = arith.constant 0 : index
    %c0_55 = arith.constant 0 : index
    %c0_56 = arith.constant 0 : index
    %151 = vector.load %arg6[%c0_54, %c0_55, %c0_56] : memref<1x8x32xf32, #tpu.memory_space<vmem>>, vector<1x8x32xf32>
    %152 = vector.shape_cast %151 : vector<1x8x32xf32> to vector<8x32xf32>
    %153 = vector.shape_cast %150 : vector<8x32xf32> to vector<1x8x32xf32>
    tpu.vector_store %arg6[%c0_54, %c0_55, %c0_56], %153 {strides = array<i32>} : memref<1x8x32xf32, #tpu.memory_space<vmem>>, vector<1x8x32xf32>,
    return
  }
  func.func @transform_0(%arg0: i32) -> (i32, i32, i32) {
    %c0_i32 = arith.constant 0 : i32
    %c0_i32_0 = arith.constant 0 : i32
    %c0_i32_1 = arith.constant 0 : i32
    return %arg0, %c0_i32, %c0_i32_0 : i32, i32, i32
  }
  func.func @transform_1(%arg0: i32) -> (i32, i32) {
    %c0_i32 = arith.constant 0 : i32
    %c0_i32_0 = arith.constant 0 : i32
    %c0_i32_1 = arith.constant 0 : i32
    return %c0_i32, %c0_i32_0 : i32, i32
  }
  func.func @transform_2(%arg0: i32) -> (i32, i32) {
    %c0_i32 = arith.constant 0 : i32
    %c0_i32_0 = arith.constant 0 : i32
    %c0_i32_1 = arith.constant 0 : i32
    return %c0_i32, %c0_i32_0 : i32, i32
  }
  func.func @transform_3(%arg0: i32) -> (i32, i32) {
    %c0_i32 = arith.constant 0 : i32
    %c0_i32_0 = arith.constant 0 : i32
    %c0_i32_1 = arith.constant 0 : i32
    return %c0_i32, %c0_i32_0 : i32, i32
  }
  func.func @transform_4(%arg0: i32) -> (i32, i32) {
    %c0_i32 = arith.constant 0 : i32
    %c0_i32_0 = arith.constant 0 : i32
    %c0_i32_1 = arith.constant 0 : i32
    return %c0_i32, %c0_i32_0 : i32, i32
  }
  func.func @transform_5(%arg0: i32) -> (i32, i32, i32) {
    %c0_i32 = arith.constant 0 : i32
    %c0_i32_0 = arith.constant 0 : i32
    %c0_i32_1 = arith.constant 0 : i32
    return %arg0, %c0_i32, %c0_i32_0 : i32, i32, i32
  }
}

</mosaic_0001>

<llo_original>
// kernel: tpu_custom_call.1
$region0: #{tpu_custom_call.1}
  #allocation0 [shape = 'u32[]', space=smem, size = 0x4, offset = 0x4, fixed_abs, tag = 'smem constant byte address 0x4 - core index']
  #allocation1 [shape = 'u32[144,128]{1,0:T(1,128)}', space=vmem, size = 0x12000, scoped, tag = 'internal scratch']
  #allocation2 [shape = 'f32[8,32]{1,0:T(8,128)}', space=vmem, size = 0x1000, scoped, tag = 'scratch operand']
  %s0 = inlined_call_operand.hbm [shape: f32[2,8,32], index: 0, kind: input, shape index: {}]
  %s1 = inlined_call_operand.hbm [shape: f32[32,96], index: 1, kind: input, shape index: {}]
  %s2 = inlined_call_operand.vmem [shape: f32[1,96], index: 2, kind: input, shape index: {}]
  %s3 = inlined_call_operand.hbm [shape: f32[32,32], index: 3, kind: input, shape index: {}]
  %s4 = inlined_call_operand.vmem [shape: f32[1,32], index: 4, kind: input, shape index: {}]
  %s5 = inlined_call_operand.hbm [shape: f32[2,8,32], index: 5, kind: output, shape index: {}]
  %s6 = sld [smem:[#allocation0]]
  $region65: #{tpu_custom_call.1} parent=0
    _
  %s8 = ssub.s32 1, %s6
  %s9 = scalar_select 0, %s8, %s6
  $region1: #{tpu_custom_call.1} parent=0
    #allocation3 [shape = 'u8[8192]{0}', space=vmem, size = 0x2000, scoped, tag = 'input window, operand 0']
    #allocation4 [shape = 's32[2]{0}', space=sflag, size = 0x8, scoped, tag = 'scoped memory for tpu_custom_call.1']
    #allocation5 [shape = 's32[2]{0}', space=sflag, size = 0x8, scoped, tag = 'scoped memory for tpu_custom_call.1']
    #allocation6 [shape = 'u8[16384]{0}', space=vmem, size = 0x4000, scoped, tag = 'input window, operand 1, single buffered']
    #allocation7 [shape = 's32[1]{0}', space=sflag, size = 0x4, scoped, tag = 'scoped memory for tpu_custom_call.1']
    #allocation8 [shape = 'u8[16384]{0}', space=vmem, size = 0x4000, scoped, tag = 'input window, operand 3, single buffered']
    #allocation9 [shape = 'u8[8192]{0}', space=vmem, size = 0x2000, scoped, tag = 'output window, operand 0']
    %10 = vsyncpa [#allocation4], 0
    %s11 = scalar_lea.sflag [#allocation4], 1
    %12 = vsyncpa %s11, 0
    %13 = vsyncpa [#allocation7], 0
    %14 = vsyncpa [#allocation5], 0
    %s15 = scalar_lea.sflag [#allocation5], 1
    %16 = vsyncpa %s15, 0
    loop: start=0, step=1, limit=4
    $region2: #{tpu_custom_call.1} parent=1 // loop_pre_header
      _
    $region3: #{tpu_custom_call.1} parent=1 // loop_header
      %s18 = sphi 0, %s22
      %p19 = scmp.ge.s32.totalorder %s18, 4
      %s28 = sphi 0, %s30
      %s31 = sphi 0, %s28
      %s32 = sphi 0, %s31
      %s48 = sphi 0, %s32
      %s52 = sphi 0, %s52
      %s54 = sphi 0, %s52
      %s55 = sphi 0, %s54
      %s69 = sphi 0, %s55
      %s73 = sphi 0, %s73
      %s75 = sphi 0, %s73
      %s76 = sphi 0, %s75
      %s90 = sphi 0, %s76
      %s94 = sphi 0, %s94
      %s96 = sphi 0, %s94
      %s97 = sphi 0, %s96
      %s111 = sphi 0, %s97
      %s115 = sphi 0, %s115
      %s117 = sphi 0, %s115
      %s118 = sphi 0, %s117
      %s132 = sphi 0, %s118
      %s138 = sphi 0, %s140
      %s141 = sphi 0, %s138
      %s142 = sphi 0, %s141
      %s158 = sphi 0, %s142
    $region4: #{tpu_custom_call.1} parent=1 // loop_header_branch
      %21 = sbr.rel (%p19) target = $region8
    $region5: #{tpu_custom_call.1} parent=1 // loop_body
      %s23 = ssub.s32 %s18, 1
      %s24 = ssub.s32 %s18, 2
      %s25 = sadd.s32 %s18, 1
      %s26 = ssub.s32 %s18, %s25
      %p27 = scmp.eq.s32.totalorder %s26, 0
      %s29 = sadd.s32 %s28, 1
      %s30 = scalar_select %p27, %s28, %s29
      %p33 = pneg %p27
      %p34 = scmp.eq.s32.totalorder %s18, 1
      %p35 = por %p33, %p34
      %p36 = scmp.ne.s32.totalorder %s28, %s31
      %p37 = scmp.eq.s32.totalorder %s18, 0
      %p38 = por %p36, %p37
      %p39 = scmp.ne.s32.totalorder %s28, %s31
      %p40 = scmp.eq.s32.totalorder %s23, 1
      %p41 = por %p39, %p40
      %p42 = scmp.ne.s32.totalorder %s31, %s32
      %p43 = scmp.eq.s32.totalorder %s23, 0
      %p44 = por %p42, %p43
      %p45 = scmp.ne.s32.totalorder %s31, %s32
      %p46 = scmp.eq.s32.totalorder %s24, 1
      %p47 = por %p45, %p46
      %p49 = scmp.ne.s32.totalorder %s32, %s48
      %p50 = scmp.eq.s32.totalorder %s24, 0
      %p51 = por %p49, %p50
      %s53 = sadd.s32 %s52, 1
      %p56 = scmp.eq.s32.totalorder %s18, 1
      %p57 = scmp.ne.s32.totalorder %s52, %s54
      %p58 = scmp.eq.s32.totalorder %s18, 0
      %p59 = por %p57, %p58
      %p60 = scmp.ne.s32.totalorder %s52, %s54
      %p61 = scmp.eq.s32.totalorder %s23, 1
      %p62 = por %p60, %p61
      %p63 = scmp.ne.s32.totalorder %s54, %s55
      %p64 = scmp.eq.s32.totalorder %s23, 0
      %p65 = por %p63, %p64
      %p66 = scmp.ne.s32.totalorder %s54, %s55
      %p67 = scmp.eq.s32.totalorder %s24, 1
      %p68 = por %p66, %p67
      %p70 = scmp.ne.s32.totalorder %s55, %s69
      %p71 = scmp.eq.s32.totalorder %s24, 0
      %p72 = por %p70, %p71
      %s74 = sadd.s32 %s73, 1
      %p77 = scmp.eq.s32.totalorder %s18, 1
      %p78 = scmp.ne.s32.totalorder %s73, %s75
      %p79 = scmp.eq.s32.totalorder %s18, 0
      %p80 = por %p78, %p79
      %p81 = scmp.ne.s32.totalorder %s73, %s75
      %p82 = scmp.eq.s32.totalorder %s23, 1
      %p83 = por %p81, %p82
      %p84 = scmp.ne.s32.totalorder %s75, %s76
      %p85 = scmp.eq.s32.totalorder %s23, 0
      %p86 = por %p84, %p85
      %p87 = scmp.ne.s32.totalorder %s75, %s76
      %p88 = scmp.eq.s32.totalorder %s24, 1
      %p89 = por %p87, %p88
      %p91 = scmp.ne.s32.totalorder %s76, %s90
      %p92 = scmp.eq.s32.totalorder %s24, 0
      %p93 = por %p91, %p92
      %s95 = sadd.s32 %s94, 1
      %p98 = scmp.eq.s32.totalorder %s18, 1
      %p99 = scmp.ne.s32.totalorder %s94, %s96
      %p100 = scmp.eq.s32.totalorder %s18, 0
      %p101 = por %p99, %p100
      %p102 = scmp.ne.s32.totalorder %s94, %s96
      %p103 = scmp.eq.s32.totalorder %s23, 1
      %p104 = por %p102, %p103
      %p105 = scmp.ne.s32.totalorder %s96, %s97
      %p106 = scmp.eq.s32.totalorder %s23, 0
      %p107 = por %p105, %p106
      %p108 = scmp.ne.s32.totalorder %s96, %s97
      %p109 = scmp.eq.s32.totalorder %s24, 1
      %p110 = por %p108, %p109
      %p112 = scmp.ne.s32.totalorder %s97, %s111
      %p113 = scmp.eq.s32.totalorder %s24, 0
      %p114 = por %p112, %p113
      %s116 = sadd.s32 %s115, 1
      %p119 = scmp.eq.s32.totalorder %s18, 1
      %p120 = scmp.ne.s32.totalorder %s115, %s117
      %p121 = scmp.eq.s32.totalorder %s18, 0
      %p122 = por %p120, %p121
      %p123 = scmp.ne.s32.totalorder %s115, %s117
      %p124 = scmp.eq.s32.totalorder %s23, 1
      %p125 = por %p123, %p124
      %p126 = scmp.ne.s32.totalorder %s117, %s118
      %p127 = scmp.eq.s32.totalorder %s23, 0
      %p128 = por %p126, %p127
      %p129 = scmp.ne.s32.totalorder %s117, %s118
      %p130 = scmp.eq.s32.totalorder %s24, 1
      %p131 = por %p129, %p130
      %p133 = scmp.ne.s32.totalorder %s118, %s132
      %p134 = scmp.eq.s32.totalorder %s24, 0
      %p135 = por %p133, %p134
      %s136 = ssub.s32 %s18, %s25
      %p137 = scmp.eq.s32.totalorder %s136, 0
      %s139 = sadd.s32 %s138, 1
      %s140 = scalar_select %p137, %s138, %s139
      %p143 = pneg %p137
      %p144 = scmp.eq.s32.totalorder %s18, 1
      %p145 = por %p143, %p144
      %p146 = scmp.ne.s32.totalorder %s138, %s141
      %p147 = scmp.eq.s32.totalorder %s18, 0
      %p148 = por %p146, %p147
      %p149 = scmp.ne.s32.totalorder %s138, %s141
      %p150 = scmp.eq.s32.totalorder %s23, 1
      %p151 = por %p149, %p150
      %p152 = scmp.ne.s32.totalorder %s141, %s142
      %p153 = scmp.eq.s32.totalorder %s23, 0
      %p154 = por %p152, %p153
      %p155 = scmp.ne.s32.totalorder %s141, %s142
      %p156 = scmp.eq.s32.totalorder %s24, 1
      %p157 = por %p155, %p156
      %p159 = scmp.ne.s32.totalorder %s142, %s158
      %p160 = scmp.eq.s32.totalorder %s24, 0
      %p161 = por %p159, %p160
      %p162 = scmp.le.s32.totalorder 1, %s18
      %p163 = scmp.lt.s32.totalorder %s18, 3
      %p164 = pnand %p162, %p163
      %p165 = pneg %p164
      // Predicated region
      $region9: #{tpu_custom_call.1} parent=5 // pred_check
        _
      $region10: #{tpu_custom_call.1} parent=5 // pred_check_branch
        %167 = sbr.rel (%p164) target = $region12
      $region11: #{tpu_custom_call.1} parent=5 // pred_region
        %s168 = ssub.s32 %s18, 1
        // Predicated region
        $region13: #{tpu_custom_call.1} parent=11 // pred_check
          %p169 = pneg %p65
        $region14: #{tpu_custom_call.1} parent=11 // pred_check_branch
          %171 = sbr.rel (%p169) target = $region16
        $region15: #{tpu_custom_call.1} parent=11 // pred_region
          %s173 = ssub.s32 512, 512
          %174 = vsyncadd [#allocation7], %s173
          %s175 = sshll.u32 [#allocation6], 4
          %s176 = int_to_ptr.vmem [resolvable:$true] %s175
          %181 = dma.hbm_to_vmem [thread:$0]  %s1, 512, %s176, [#allocation7], 128, 128, 8
        $region16: #{tpu_custom_call.1} parent=11 // pred_fallthru
          _
        // Predicated region
        $region17: #{tpu_custom_call.1} parent=11 // pred_check
          %p182 = pneg %p86
        $region18: #{tpu_custom_call.1} parent=11 // pred_check_branch
          %184 = sbr.rel (%p182) target = $region20
        $region19: #{tpu_custom_call.1} parent=11 // pred_region
          _
        $region20: #{tpu_custom_call.1} parent=11 // pred_fallthru
          _
        // Predicated region
        $region21: #{tpu_custom_call.1} parent=11 // pred_check
          %p185 = pneg %p107
        $region22: #{tpu_custom_call.1} parent=11 // pred_check_branch
          %187 = sbr.rel (%p185) target = $region24
        $region23: #{tpu_custom_call.1} parent=11 // pred_region
          %s189 = ssub.s32 512, 512
          %190 = vsyncadd [#allocation7], %s189
          %s191 = sshll.u32 [#allocation8], 4
          %s192 = int_to_ptr.vmem [resolvable:$true] %s191
          %197 = dma.hbm_to_vmem [thread:$0]  %s3, 512, %s192, [#allocation7], 128, 128, 8
        $region24: #{tpu_custom_call.1} parent=11 // pred_fallthru
          _
        // Predicated region
        $region25: #{tpu_custom_call.1} parent=11 // pred_check
          %p198 = pneg %p128
        $region26: #{tpu_custom_call.1} parent=11 // pred_check_branch
          %200 = sbr.rel (%p198) target = $region28
        $region27: #{tpu_custom_call.1} parent=11 // pred_region
          _
        $region28: #{tpu_custom_call.1} parent=11 // pred_fallthru
          _
      $region12: #{tpu_custom_call.1} parent=5 // pred_fallthru
        _
      %p201 = scmp.lt.s32.totalorder %s18, 2
      // Predicated region
      $region29: #{tpu_custom_call.1} parent=5 // pred_check
        %p202 = pneg %p201
      $region30: #{tpu_custom_call.1} parent=5 // pred_check_branch
        %204 = sbr.rel (%p202) target = $region32
      $region31: #{tpu_custom_call.1} parent=5 // pred_region
        // Predicated region
        $region33: #{tpu_custom_call.1} parent=31 // pred_check
          %p205 = pneg %p38
        $region34: #{tpu_custom_call.1} parent=31 // pred_check_branch
          %207 = sbr.rel (%p205) target = $region36
        $region35: #{tpu_custom_call.1} parent=31 // pred_region
          %s208 = sand.u32 %s28, 1
          %s209 = scalar_lea.sflag [#allocation4], %s208
          %s210 = sand.u32 %s28, 1
          %s211 = smul.addr %s210, 8
          %s212 = scalar_lea.vmem [#allocation3], %s211
          %s214 = ssub.s32 128, 128
          %215 = vsyncadd %s209, %s214
          %s216 = smul.addr %s18, 128
          %s217 = scalar_lea.hbm %s0, %s216
          %s219 = sshll.u32 %s212, 4
          %s220 = int_to_ptr.vmem [resolvable:$true] %s219
          %222 = dma.hbm_to_vmem [thread:$0]  %s217, 128, %s220, %s209
        $region36: #{tpu_custom_call.1} parent=31 // pred_fallthru
          _
      $region32: #{tpu_custom_call.1} parent=5 // pred_fallthru
        _
      %p223 = scmp.le.s32.totalorder 1, %s18
      %p224 = scmp.lt.s32.totalorder %s18, 3
      %p225 = pnand %p223, %p224
      %p226 = pneg %p225
      // Predicated region
      $region37: #{tpu_custom_call.1} parent=5 // pred_check
        _
      $region38: #{tpu_custom_call.1} parent=5 // pred_check_branch
        %228 = sbr.rel (%p225) target = $region40
      $region39: #{tpu_custom_call.1} parent=5 // pred_region
        %s229 = ssub.s32 %s18, 1
        %s230 = sand.u32 %s31, 1
        %s231 = scalar_lea.sflag [#allocation4], %s230
        %s232 = sand.u32 %s31, 1
        %s233 = smul.addr %s232, 8
        %s234 = scalar_lea.vmem [#allocation3], %s233
        // Predicated region
        $region41: #{tpu_custom_call.1} parent=39 // pred_check
          %p235 = pneg %p44
        $region42: #{tpu_custom_call.1} parent=39 // pred_check_branch
          %237 = sbr.rel (%p235) target = $region44
        $region43: #{tpu_custom_call.1} parent=39 // pred_region
          %238 = dma.done %s231, 128
        $region44: #{tpu_custom_call.1} parent=39 // pred_fallthru
          _
        // Predicated region
        $region45: #{tpu_custom_call.1} parent=39 // pred_check
          %p239 = pneg %p65
        $region46: #{tpu_custom_call.1} parent=39 // pred_check_branch
          %241 = sbr.rel (%p239) target = $region48
        $region47: #{tpu_custom_call.1} parent=39 // pred_region
          %242 = dma.done [#allocation7], 512
        $region48: #{tpu_custom_call.1} parent=39 // pred_fallthru
          _
        // Predicated region
        $region49: #{tpu_custom_call.1} parent=39 // pred_check
          %p243 = pneg %p107
        $region50: #{tpu_custom_call.1} parent=39 // pred_check_branch
          %245 = sbr.rel (%p243) target = $region52
        $region51: #{tpu_custom_call.1} parent=39 // pred_region
          %246 = dma.done [#allocation7], 512
        $region52: #{tpu_custom_call.1} parent=39 // pred_fallthru
          _
        %s247 = sand.u32 %s31, 1
        %s248 = scalar_lea.sflag [#allocation4], %s247
        %s249 = sand.u32 %s31, 1
        %s250 = smul.addr %s249, 8
        %s251 = scalar_lea.vmem [#allocation3], %s250
        %p252 = pneg %p44
        %p253 = pneg %p41
        %p254 = pneg %p65
        %p255 = pneg %p62
        %p256 = pneg %p86
        %p257 = pneg %p83
        %p258 = pneg %p107
        %p259 = pneg %p104
        %p260 = pneg %p128
        %p261 = pneg %p125
        %p262 = pneg %p154
        %p263 = pneg %p151
        %s264 = sand.u32 %s141, 1
        %s265 = scalar_lea.sflag [#allocation5], %s264
        %s266 = sand.u32 %s141, 1
        %s267 = smul.addr %s266, 8
        %s268 = scalar_lea.vmem [#allocation9], %s267
        %v269 = vld [vmem:[%s234] sm:$0xff]
        %v270 = vld [vmem:[#allocation6] sm:$0xff]
        %v271 = vld [vmem:[#allocation6 + $0x8] sm:$0xff]
        %v272 = vld [vmem:[#allocation6 + $0x10] sm:$0xff]
        %v273 = vld [vmem:[#allocation6 + $0x18] sm:$0xff]
        %v274 = vld [vmem:[%s2] sm:$0x1]
        %v276 = vlaneseq
        %v277 = vshrl.u32 %v276, 7
        %v278 = vsub.s32 0, %v277
        %v279 = vrot.slane %v274, %v278
        %vm281 = vcmask 261120
        %v283 = vsel %vm281, %v269, 0
        %285 = vmatprep.subr.mxu0 0.0
        %286 = vmatpush1.msra.mxu0 0.0
        %287 = vmatprep.subr.mxu0 0.0
        %288 = vmatpush1.msra.mxu0 0.0
        %289 = vmatprep.subr.mxu0 0.0
        %290 = vmatpush1.msra.mxu0 0.0
        %291 = vmatprep.subr.mxu0 0.0
        %292 = vmatpush1.msra.mxu0 0.0
        %293 = vmatprep.subr.mxu0 0.0
        %294 = vmatpush1.msra.mxu0 0.0
        %295 = vmatprep.subr.mxu0 0.0
        %296 = vmatpush1.msra.mxu0 0.0
        %297 = vmatprep.subr.mxu0 0.0
        %298 = vmatpush1.msra.mxu0 0.0
        %299 = vmatprep.subr.mxu0 0.0
        %300 = vmatpush1.msra.mxu0 0.0
        %301 = vmatprep.subr.mxu0 0.0
        %302 = vmatpush1.msra.mxu0 0.0
        %303 = vmatprep.subr.mxu0 0.0
        %304 = vmatpush1.msra.mxu0 0.0
        %305 = vmatprep.subr.mxu0 0.0
        %306 = vmatpush1.msra.mxu0 0.0
        %307 = vmatprep.subr.mxu0 0.0
        %308 = vmatpush1.msra.mxu0 0.0
        %309 = vmatprep.subr.mxu0 0.0
        %310 = vmatpush1.msra.mxu0 %v273
        %311 = vmatprep.subr.mxu0 0.0
        %312 = vmatpush1.msra.mxu0 %v272
        %313 = vmatprep.subr.mxu0 0.0
        %314 = vmatpush1.msra.mxu0 %v271
        %315 = vmatprep.subr.mxu0 0.0
        %316 = vmatpush1.msra.mxu0 %v270
        %317 = vmatprep.subr.mxu0 0.0
        %318 = vmatpush2.msra.mxu0 0.0
        %319 = vmatprep.subr.mxu0 0.0
        %320 = vmatpush2.msra.mxu0 0.0
        %321 = vmatprep.subr.mxu0 0.0
        %322 = vmatpush2.msra.mxu0 0.0
        %323 = vmatprep.subr.mxu0 0.0
        %324 = vmatpush2.msra.mxu0 0.0
        %325 = vmatprep.subr.mxu0 0.0
        %326 = vmatpush2.msra.mxu0 0.0
        %327 = vmatprep.subr.mxu0 0.0
        %328 = vmatpush2.msra.mxu0 0.0
        %329 = vmatprep.subr.mxu0 0.0
        %330 = vmatpush2.msra.mxu0 0.0
        %331 = vmatprep.subr.mxu0 0.0
        %332 = vmatpush2.msra.mxu0 0.0
        %333 = vmatprep.subr.mxu0 0.0
        %334 = vmatpush2.msra.mxu0 0.0
        %335 = vmatprep.subr.mxu0 0.0
        %336 = vmatpush2.msra.mxu0 0.0
        %337 = vmatprep.subr.mxu0 0.0
        %338 = vmatpush2.msra.mxu0 0.0
        %339 = vmatprep.subr.mxu0 0.0
        %340 = vmatpush2.msra.mxu0 0.0
        %341 = vmatprep.subr.mxu0 0.0
        %342 = vmatpush2.msra.mxu0 0.0
        %343 = vmatprep.subr.mxu0 0.0
        %344 = vmatpush2.msra.mxu0 0.0
        %345 = vmatprep.subr.mxu0 0.0
        %346 = vmatpush2.msra.mxu0 0.0
        %347 = vmatprep.subr.mxu0 0.0
        %348 = vmatpush2.msra.mxu0 0.0
        %349 = vmatprep.mubr.f32.mxu0 0.0
        %350 = vmatmul.mubr.f32.gmra.mxu0 %v283
        %v351 = vpop.f32.mrf.mxu0
        %v352 = vadd.f32 %v279, %v351
        %v353 = vpop.f32.mrf.mxu0
        %354 = vdwg.mxu0
        %v355 = vmul.f32 %v352, 0.35355338
        %v356 = vlaneseq
        %v357 = vshrl.u32 %v356, 7
        %359 = vrot.lane.b32.xlu0 %v352, 96
        %v360 = vpop.permute.xlu0 %359
        %vm361 = vcmask 64512
        %v363 = vsel %vm361, %v355, 0
        %v365 = vsel %vm361, %v360, 0
        %367 = vmatprep.subr.mxu0 0.0
        %368 = vmatpush1.xpose.msra.mxu0 0.0
        %369 = vmatprep.subr.mxu0 0.0
        %370 = vmatpush1.xpose.msra.mxu0 0.0
        %371 = vmatprep.subr.mxu0 0.0
        %372 = vmatpush1.xpose.msra.mxu0 0.0
        %373 = vmatprep.subr.mxu0 0.0
        %374 = vmatpush1.xpose.msra.mxu0 0.0
        %375 = vmatprep.subr.mxu0 0.0
        %376 = vmatpush1.xpose.msra.mxu0 0.0
        %377 = vmatprep.subr.mxu0 0.0
        %378 = vmatpush1.xpose.msra.mxu0 0.0
        %379 = vmatprep.subr.mxu0 0.0
        %380 = vmatpush1.xpose.msra.mxu0 0.0
        %381 = vmatprep.subr.mxu0 0.0
        %382 = vmatpush1.xpose.msra.mxu0 0.0
        %383 = vmatprep.subr.mxu0 0.0
        %384 = vmatpush1.xpose.msra.mxu0 0.0
        %385 = vmatprep.subr.mxu0 0.0
        %386 = vmatpush1.xpose.msra.mxu0 0.0
        %387 = vmatprep.subr.mxu0 0.0
        %388 = vmatpush1.xpose.msra.mxu0 0.0
        %389 = vmatprep.subr.mxu0 0.0
        %390 = vmatpush1.xpose.msra.mxu0 0.0
        %391 = vmatprep.subr.mxu0 0.0
        %392 = vmatpush1.xpose.msra.mxu0 0.0
        %393 = vmatprep.subr.mxu0 0.0
        %394 = vmatpush1.xpose.msra.mxu0 0.0
        %395 = vmatprep.subr.mxu0 0.0
        %396 = vmatpush1.xpose.msra.mxu0 0.0
        %397 = vmatprep.subr.mxu0 0.0
        %398 = vmatpush1.xpose.msra.mxu0 %v365
        %399 = vmatprep.subr.mxu0 0.0
        %400 = vmatpush2.xpose.msra.mxu0 0.0
        %401 = vmatprep.subr.mxu0 0.0
        %402 = vmatpush2.xpose.msra.mxu0 0.0
        %403 = vmatprep.subr.mxu0 0.0
        %404 = vmatpush2.xpose.msra.mxu0 0.0
        %405 = vmatprep.subr.mxu0 0.0
        %406 = vmatpush2.xpose.msra.mxu0 0.0
        %407 = vmatprep.subr.mxu0 0.0
        %408 = vmatpush2.xpose.msra.mxu0 0.0
        %409 = vmatprep.subr.mxu0 0.0
        %410 = vmatpush2.xpose.msra.mxu0 0.0
        %411 = vmatprep.subr.mxu0 0.0
        %412 = vmatpush2.xpose.msra.mxu0 0.0
        %413 = vmatprep.subr.mxu0 0.0
        %414 = vmatpush2.xpose.msra.mxu0 0.0
        %415 = vmatprep.subr.mxu0 0.0
        %416 = vmatpush2.xpose.msra.mxu0 0.0
        %417 = vmatprep.subr.mxu0 0.0
        %418 = vmatpush2.xpose.msra.mxu0 0.0
        %419 = vmatprep.subr.mxu0 0.0
        %420 = vmatpush2.xpose.msra.mxu0 0.0
        %421 = vmatprep.subr.mxu0 0.0
        %422 = vmatpush2.xpose.msra.mxu0 0.0
        %423 = vmatprep.subr.mxu0 0.0
        %424 = vmatpush2.xpose.msra.mxu0 0.0
        %425 = vmatprep.subr.mxu0 0.0
        %426 = vmatpush2.xpose.msra.mxu0 0.0
        %427 = vmatprep.subr.mxu0 0.0
        %428 = vmatpush2.xpose.msra.mxu0 0.0
        %429 = vmatprep.subr.mxu0 0.0
        %430 = vmatpush2.xpose.msra.mxu0 0.0
        %431 = vmatprep.mubr.f32.mxu0 0.0
        %432 = vmatmul.mubr.f32.gmra.mxu0 %v363
        %v433 = vpop.f32.mrf.mxu0
        %v434 = vadd.f32 0.0, %v433
        %v435 = vpop.f32.mrf.mxu0
        %436 = vdwg.mxu0
        %v437 = vlaneseq
        %v438 = vand.u32 %v437, 127
        %vm439 = vcmp.gt.s32.totalorder %v438, %v357
        %v440 = vsel %vm439, -1e+30, %v434
        %v441 = vsel %vm361, %v440, -inf
        %442 = vmax.xlane.f32.xlu0 %v441
        %v443 = vpop.xlane.xlu0 %442
        %v444 = vmax.f32 %v443, -1e+30
        %v445 = vsub.f32 -1e+30, %v444
        %v446 = vmul.f32 %v445, 1.442695
        %v447 = vpow.pop %v446
        %v448 = vsub.f32 %v440, %v444
        %v449 = vmul.f32 %v448, 1.442695
        %v450 = vpow.pop %v449
        %v451 = vmul.f32 %v447, 0.0
        %v452 = vsel %vm361, %v450, 0.0
        %453 = vadd.xlane.f32.xlu0 %v452
        %v454 = vpop.xlane.xlu0 %453
        %v455 = vadd.f32 %v451, %v454
        %456 = vrot.lane.b32.xlu0 %v352, 64
        %v457 = vpop.permute.xlu0 %456
        %v460 = vsel %vm361, %v450, 0
        %462 = vmatprep.subr.mxu0 0.0
        %463 = vmatpush1.msra.mxu0 0.0
        %464 = vmatprep.subr.mxu0 0.0
        %465 = vmatpush1.msra.mxu0 0.0
        %466 = vmatprep.subr.mxu0 0.0
        %467 = vmatpush1.msra.mxu0 0.0
        %468 = vmatprep.subr.mxu0 0.0
        %469 = vmatpush1.msra.mxu0 0.0
        %470 = vmatprep.subr.mxu0 0.0
        %471 = vmatpush1.msra.mxu0 0.0
        %472 = vmatprep.subr.mxu0 0.0
        %473 = vmatpush1.msra.mxu0 0.0
        %474 = vmatprep.subr.mxu0 0.0
        %475 = vmatpush1.msra.mxu0 0.0
        %476 = vmatprep.subr.mxu0 0.0
        %477 = vmatpush1.msra.mxu0 0.0
        %478 = vmatprep.subr.mxu0 0.0
        %479 = vmatpush1.msra.mxu0 0.0
        %480 = vmatprep.subr.mxu0 0.0
        %481 = vmatpush1.msra.mxu0 0.0
        %482 = vmatprep.subr.mxu0 0.0
        %483 = vmatpush1.msra.mxu0 0.0
        %484 = vmatprep.subr.mxu0 0.0
        %485 = vmatpush1.msra.mxu0 0.0
        %486 = vmatprep.subr.mxu0 0.0
        %487 = vmatpush1.msra.mxu0 0.0
        %488 = vmatprep.subr.mxu0 0.0
        %489 = vmatpush1.msra.mxu0 0.0
        %490 = vmatprep.subr.mxu0 0.0
        %491 = vmatpush1.msra.mxu0 0.0
        %492 = vmatprep.subr.mxu0 0.0
        %493 = vmatpush1.msra.mxu0 %v457
        %494 = vmatprep.subr.mxu0 0.0
        %495 = vmatpush2.msra.mxu0 0.0
        %496 = vmatprep.subr.mxu0 0.0
        %497 = vmatpush2.msra.mxu0 0.0
        %498 = vmatprep.subr.mxu0 0.0
        %499 = vmatpush2.msra.mxu0 0.0
        %500 = vmatprep.subr.mxu0 0.0
        %501 = vmatpush2.msra.mxu0 0.0
        %502 = vmatprep.subr.mxu0 0.0
        %503 = vmatpush2.msra.mxu0 0.0
        %504 = vmatprep.subr.mxu0 0.0
        %505 = vmatpush2.msra.mxu0 0.0
        %506 = vmatprep.subr.mxu0 0.0
        %507 = vmatpush2.msra.mxu0 0.0
        %508 = vmatprep.subr.mxu0 0.0
        %509 = vmatpush2.msra.mxu0 0.0
        %510 = vmatprep.subr.mxu0 0.0
        %511 = vmatpush2.msra.mxu0 0.0
        %512 = vmatprep.subr.mxu0 0.0
        %513 = vmatpush2.msra.mxu0 0.0
        %514 = vmatprep.subr.mxu0 0.0
        %515 = vmatpush2.msra.mxu0 0.0
        %516 = vmatprep.subr.mxu0 0.0
        %517 = vmatpush2.msra.mxu0 0.0
        %518 = vmatprep.subr.mxu0 0.0
        %519 = vmatpush2.msra.mxu0 0.0
        %520 = vmatprep.subr.mxu0 0.0
        %521 = vmatpush2.msra.mxu0 0.0
        %522 = vmatprep.subr.mxu0 0.0
        %523 = vmatpush2.msra.mxu0 0.0
        %524 = vmatprep.subr.mxu0 0.0
        %525 = vmatpush2.msra.mxu0 0.0
        %526 = vmatprep.mubr.f32.mxu0 0.0
        %527 = vmatmul.mubr.f32.gmra.mxu0 %v460
        %v528 = vpop.f32.mrf.mxu0
        %v529 = vadd.f32 0.0, %v528
        %v530 = vpop.f32.mrf.mxu0
        %531 = vdwg.mxu0
        %v532 = vadd.f32 %v451, %v529
        %v533 = vrcp.pop %v455
        %v534 = vmul.f32 %v532, %v533
        %535 = vst.msk [vmem:[#allocation2] sm:$0xff] %vm361, %v534
        %536 = vrot.lane.b32.xlu0 %v355, 120
        %v537 = vpop.permute.xlu0 %536
        %538 = vrot.lane.b32.xlu0 %v352, 88
        %v539 = vpop.permute.xlu0 %538
        %v540 = vsel %vm361, %v537, 0
        %v542 = vsel %vm361, %v539, 0
        %544 = vmatprep.subr.mxu0 0.0
        %545 = vmatpush1.xpose.msra.mxu0 0.0
        %546 = vmatprep.subr.mxu0 0.0
        %547 = vmatpush1.xpose.msra.mxu0 0.0
        %548 = vmatprep.subr.mxu0 0.0
        %549 = vmatpush1.xpose.msra.mxu0 0.0
        %550 = vmatprep.subr.mxu0 0.0
        %551 = vmatpush1.xpose.msra.mxu0 0.0
        %552 = vmatprep.subr.mxu0 0.0
        %553 = vmatpush1.xpose.msra.mxu0 0.0
        %554 = vmatprep.subr.mxu0 0.0
        %555 = vmatpush1.xpose.msra.mxu0 0.0
        %556 = vmatprep.subr.mxu0 0.0
        %557 = vmatpush1.xpose.msra.mxu0 0.0
        %558 = vmatprep.subr.mxu0 0.0
        %559 = vmatpush1.xpose.msra.mxu0 0.0
        %560 = vmatprep.subr.mxu0 0.0
        %561 = vmatpush1.xpose.msra.mxu0 0.0
        %562 = vmatprep.subr.mxu0 0.0
        %563 = vmatpush1.xpose.msra.mxu0 0.0
        %564 = vmatprep.subr.mxu0 0.0
        %565 = vmatpush1.xpose.msra.mxu0 0.0
        %566 = vmatprep.subr.mxu0 0.0
        %567 = vmatpush1.xpose.msra.mxu0 0.0
        %568 = vmatprep.subr.mxu0 0.0
        %569 = vmatpush1.xpose.msra.mxu0 0.0
        %570 = vmatprep.subr.mxu0 0.0
        %571 = vmatpush1.xpose.msra.mxu0 0.0
        %572 = vmatprep.subr.mxu0 0.0
        %573 = vmatpush1.xpose.msra.mxu0 0.0
        %574 = vmatprep.subr.mxu0 0.0
        %575 = vmatpush1.xpose.msra.mxu0 %v542
        %576 = vmatprep.subr.mxu0 0.0
        %577 = vmatpush2.xpose.msra.mxu0 0.0
        %578 = vmatprep.subr.mxu0 0.0
        %579 = vmatpush2.xpose.msra.mxu0 0.0
        %580 = vmatprep.subr.mxu0 0.0
        %581 = vmatpush2.xpose.msra.mxu0 0.0
        %582 = vmatprep.subr.mxu0 0.0
        %583 = vmatpush2.xpose.msra.mxu0 0.0
        %584 = vmatprep.subr.mxu0 0.0
        %585 = vmatpush2.xpose.msra.mxu0 0.0
        %586 = vmatprep.subr.mxu0 0.0
        %587 = vmatpush2.xpose.msra.mxu0 0.0
        %588 = vmatprep.subr.mxu0 0.0
        %589 = vmatpush2.xpose.msra.mxu0 0.0
        %590 = vmatprep.subr.mxu0 0.0
        %591 = vmatpush2.xpose.msra.mxu0 0.0
        %592 = vmatprep.subr.mxu0 0.0
        %593 = vmatpush2.xpose.msra.mxu0 0.0
        %594 = vmatprep.subr.mxu0 0.0
        %595 = vmatpush2.xpose.msra.mxu0 0.0
        %596 = vmatprep.subr.mxu0 0.0
        %597 = vmatpush2.xpose.msra.mxu0 0.0
        %598 = vmatprep.subr.mxu0 0.0
        %599 = vmatpush2.xpose.msra.mxu0 0.0
        %600 = vmatprep.subr.mxu0 0.0
        %601 = vmatpush2.xpose.msra.mxu0 0.0
        %602 = vmatprep.subr.mxu0 0.0
        %603 = vmatpush2.xpose.msra.mxu0 0.0
        %604 = vmatprep.subr.mxu0 0.0
        %605 = vmatpush2.xpose.msra.mxu0 0.0
        %606 = vmatprep.subr.mxu0 0.0
        %607 = vmatpush2.xpose.msra.mxu0 0.0
        %608 = vmatprep.mubr.f32.mxu0 0.0
        %609 = vmatmul.mubr.f32.gmra.mxu0 %v540
        %v610 = vpop.f32.mrf.mxu0
        %v611 = vadd.f32 0.0, %v610
        %v612 = vpop.f32.mrf.mxu0
        %613 = vdwg.mxu0
        %v614 = vsel %vm439, -1e+30, %v611
        %v615 = vsel %vm361, %v614, -inf
        %616 = vmax.xlane.f32.xlu0 %v615
        %v617 = vpop.xlane.xlu0 %616
        %v618 = vmax.f32 %v617, -1e+30
        %v619 = vsub.f32 -1e+30, %v618
        %v620 = vmul.f32 %v619, 1.442695
        %v621 = vpow.pop %v620
        %v622 = vsub.f32 %v614, %v618
        %v623 = vmul.f32 %v622, 1.442695
        %v624 = vpow.pop %v623
        %v625 = vmul.f32 %v621, 0.0
        %v626 = vsel %vm361, %v624, 0.0
        %627 = vadd.xlane.f32.xlu0 %v626
        %v628 = vpop.xlane.xlu0 %627
        %v629 = vadd.f32 %v625, %v628
        %630 = vrot.lane.b32.xlu0 %v352, 56
        %v631 = vpop.permute.xlu0 %630
        %v634 = vsel %vm361, %v624, 0
        %636 = vmatprep.subr.mxu0 0.0
        %637 = vmatpush1.msra.mxu0 0.0
        %638 = vmatprep.subr.mxu0 0.0
        %639 = vmatpush1.msra.mxu0 0.0
        %640 = vmatprep.subr.mxu0 0.0
        %641 = vmatpush1.msra.mxu0 0.0
        %642 = vmatprep.subr.mxu0 0.0
        %643 = vmatpush1.msra.mxu0 0.0
        %644 = vmatprep.subr.mxu0 0.0
        %645 = vmatpush1.msra.mxu0 0.0
        %646 = vmatprep.subr.mxu0 0.0
        %647 = vmatpush1.msra.mxu0 0.0
        %648 = vmatprep.subr.mxu0 0.0
        %649 = vmatpush1.msra.mxu0 0.0
        %650 = vmatprep.subr.mxu0 0.0
        %651 = vmatpush1.msra.mxu0 0.0
        %652 = vmatprep.subr.mxu0 0.0
        %653 = vmatpush1.msra.mxu0 0.0
        %654 = vmatprep.subr.mxu0 0.0
        %655 = vmatpush1.msra.mxu0 0.0
        %656 = vmatprep.subr.mxu0 0.0
        %657 = vmatpush1.msra.mxu0 0.0
        %658 = vmatprep.subr.mxu0 0.0
        %659 = vmatpush1.msra.mxu0 0.0
        %660 = vmatprep.subr.mxu0 0.0
        %661 = vmatpush1.msra.mxu0 0.0
        %662 = vmatprep.subr.mxu0 0.0
        %663 = vmatpush1.msra.mxu0 0.0
        %664 = vmatprep.subr.mxu0 0.0
        %665 = vmatpush1.msra.mxu0 0.0
        %666 = vmatprep.subr.mxu0 0.0
        %667 = vmatpush1.msra.mxu0 %v631
        %668 = vmatprep.subr.mxu0 0.0
        %669 = vmatpush2.msra.mxu0 0.0
        %670 = vmatprep.subr.mxu0 0.0
        %671 = vmatpush2.msra.mxu0 0.0
        %672 = vmatprep.subr.mxu0 0.0
        %673 = vmatpush2.msra.mxu0 0.0
        %674 = vmatprep.subr.mxu0 0.0
        %675 = vmatpush2.msra.mxu0 0.0
        %676 = vmatprep.subr.mxu0 0.0
        %677 = vmatpush2.msra.mxu0 0.0
        %678 = vmatprep.subr.mxu0 0.0
        %679 = vmatpush2.msra.mxu0 0.0
        %680 = vmatprep.subr.mxu0 0.0
        %681 = vmatpush2.msra.mxu0 0.0
        %682 = vmatprep.subr.mxu0 0.0
        %683 = vmatpush2.msra.mxu0 0.0
        %684 = vmatprep.subr.mxu0 0.0
        %685 = vmatpush2.msra.mxu0 0.0
        %686 = vmatprep.subr.mxu0 0.0
        %687 = vmatpush2.msra.mxu0 0.0
        %688 = vmatprep.subr.mxu0 0.0
        %689 = vmatpush2.msra.mxu0 0.0
        %690 = vmatprep.subr.mxu0 0.0
        %691 = vmatpush2.msra.mxu0 0.0
        %692 = vmatprep.subr.mxu0 0.0
        %693 = vmatpush2.msra.mxu0 0.0
        %694 = vmatprep.subr.mxu0 0.0
        %695 = vmatpush2.msra.mxu0 0.0
        %696 = vmatprep.subr.mxu0 0.0
        %697 = vmatpush2.msra.mxu0 0.0
        %698 = vmatprep.subr.mxu0 0.0
        %699 = vmatpush2.msra.mxu0 0.0
        %700 = vmatprep.mubr.f32.mxu0 0.0
        %701 = vmatmul.mubr.f32.gmra.mxu0 %v634
        %v702 = vpop.f32.mrf.mxu0
        %v703 = vadd.f32 0.0, %v702
        %v704 = vpop.f32.mrf.mxu0
        %705 = vdwg.mxu0
        %v706 = vadd.f32 %v625, %v703
        %v707 = vrcp.pop %v629
        %v708 = vmul.f32 %v706, %v707
        %710 = vrot.lane.b32.xlu0 %v708, 8
        %v711 = vpop.permute.xlu0 %710
        %vm713 = vcmask 130112
        %714 = vst.msk [vmem:[#allocation2] sm:$0xff] %vm713, %v711
        %715 = vrot.lane.b32.xlu0 %v355, 112
        %v716 = vpop.permute.xlu0 %715
        %717 = vrot.lane.b32.xlu0 %v352, 80
        %v718 = vpop.permute.xlu0 %717
        %v719 = vsel %vm361, %v716, 0
        %v721 = vsel %vm361, %v718, 0
        %723 = vmatprep.subr.mxu0 0.0
        %724 = vmatpush1.xpose.msra.mxu0 0.0
        %725 = vmatprep.subr.mxu0 0.0
        %726 = vmatpush1.xpose.msra.mxu0 0.0
        %727 = vmatprep.subr.mxu0 0.0
        %728 = vmatpush1.xpose.msra.mxu0 0.0
        %729 = vmatprep.subr.mxu0 0.0
        %730 = vmatpush1.xpose.msra.mxu0 0.0
        %731 = vmatprep.subr.mxu0 0.0
        %732 = vmatpush1.xpose.msra.mxu0 0.0
        %733 = vmatprep.subr.mxu0 0.0
        %734 = vmatpush1.xpose.msra.mxu0 0.0
        %735 = vmatprep.subr.mxu0 0.0
        %736 = vmatpush1.xpose.msra.mxu0 0.0
        %737 = vmatprep.subr.mxu0 0.0
        %738 = vmatpush1.xpose.msra.mxu0 0.0
        %739 = vmatprep.subr.mxu0 0.0
        %740 = vmatpush1.xpose.msra.mxu0 0.0
        %741 = vmatprep.subr.mxu0 0.0
        %742 = vmatpush1.xpose.msra.mxu0 0.0
        %743 = vmatprep.subr.mxu0 0.0
        %744 = vmatpush1.xpose.msra.mxu0 0.0
        %745 = vmatprep.subr.mxu0 0.0
        %746 = vmatpush1.xpose.msra.mxu0 0.0
        %747 = vmatprep.subr.mxu0 0.0
        %748 = vmatpush1.xpose.msra.mxu0 0.0
        %749 = vmatprep.subr.mxu0 0.0
        %750 = vmatpush1.xpose.msra.mxu0 0.0
        %751 = vmatprep.subr.mxu0 0.0
        %752 = vmatpush1.xpose.msra.mxu0 0.0
        %753 = vmatprep.subr.mxu0 0.0
        %754 = vmatpush1.xpose.msra.mxu0 %v721
        %755 = vmatprep.subr.mxu0 0.0
        %756 = vmatpush2.xpose.msra.mxu0 0.0
        %757 = vmatprep.subr.mxu0 0.0
        %758 = vmatpush2.xpose.msra.mxu0 0.0
        %759 = vmatprep.subr.mxu0 0.0
        %760 = vmatpush2.xpose.msra.mxu0 0.0
        %761 = vmatprep.subr.mxu0 0.0
        %762 = vmatpush2.xpose.msra.mxu0 0.0
        %763 = vmatprep.subr.mxu0 0.0
        %764 = vmatpush2.xpose.msra.mxu0 0.0
        %765 = vmatprep.subr.mxu0 0.0
        %766 = vmatpush2.xpose.msra.mxu0 0.0
        %767 = vmatprep.subr.mxu0 0.0
        %768 = vmatpush2.xpose.msra.mxu0 0.0
        %769 = vmatprep.subr.mxu0 0.0
        %770 = vmatpush2.xpose.msra.mxu0 0.0
        %771 = vmatprep.subr.mxu0 0.0
        %772 = vmatpush2.xpose.msra.mxu0 0.0
        %773 = vmatprep.subr.mxu0 0.0
        %774 = vmatpush2.xpose.msra.mxu0 0.0
        %775 = vmatprep.subr.mxu0 0.0
        %776 = vmatpush2.xpose.msra.mxu0 0.0
        %777 = vmatprep.subr.mxu0 0.0
        %778 = vmatpush2.xpose.msra.mxu0 0.0
        %779 = vmatprep.subr.mxu0 0.0
        %780 = vmatpush2.xpose.msra.mxu0 0.0
        %781 = vmatprep.subr.mxu0 0.0
        %782 = vmatpush2.xpose.msra.mxu0 0.0
        %783 = vmatprep.subr.mxu0 0.0
        %784 = vmatpush2.xpose.msra.mxu0 0.0
        %785 = vmatprep.subr.mxu0 0.0
        %786 = vmatpush2.xpose.msra.mxu0 0.0
        %787 = vmatprep.mubr.f32.mxu0 0.0
        %788 = vmatmul.mubr.f32.gmra.mxu0 %v719
        %v789 = vpop.f32.mrf.mxu0
        %v790 = vadd.f32 0.0, %v789
        %v791 = vpop.f32.mrf.mxu0
        %792 = vdwg.mxu0
        %v793 = vsel %vm439, -1e+30, %v790
        %v794 = vsel %vm361, %v793, -inf
        %795 = vmax.xlane.f32.xlu0 %v794
        %v796 = vpop.xlane.xlu0 %795
        %v797 = vmax.f32 %v796, -1e+30
        %v798 = vsub.f32 -1e+30, %v797
        %v799 = vmul.f32 %v798, 1.442695
        %v800 = vpow.pop %v799
        %v801 = vsub.f32 %v793, %v797
        %v802 = vmul.f32 %v801, 1.442695
        %v803 = vpow.pop %v802
        %v804 = vmul.f32 %v800, 0.0
        %v805 = vsel %vm361, %v803, 0.0
        %806 = vadd.xlane.f32.xlu0 %v805
        %v807 = vpop.xlane.xlu0 %806
        %v808 = vadd.f32 %v804, %v807
        %809 = vrot.lane.b32.xlu0 %v352, 48
        %v810 = vpop.permute.xlu0 %809
        %v813 = vsel %vm361, %v803, 0
        %815 = vmatprep.subr.mxu0 0.0
        %816 = vmatpush1.msra.mxu0 0.0
        %817 = vmatprep.subr.mxu0 0.0
        %818 = vmatpush1.msra.mxu0 0.0
        %819 = vmatprep.subr.mxu0 0.0
        %820 = vmatpush1.msra.mxu0 0.0
        %821 = vmatprep.subr.mxu0 0.0
        %822 = vmatpush1.msra.mxu0 0.0
        %823 = vmatprep.subr.mxu0 0.0
        %824 = vmatpush1.msra.mxu0 0.0
        %825 = vmatprep.subr.mxu0 0.0
        %826 = vmatpush1.msra.mxu0 0.0
        %827 = vmatprep.subr.mxu0 0.0
        %828 = vmatpush1.msra.mxu0 0.0
        %829 = vmatprep.subr.mxu0 0.0
        %830 = vmatpush1.msra.mxu0 0.0
        %831 = vmatprep.subr.mxu0 0.0
        %832 = vmatpush1.msra.mxu0 0.0
        %833 = vmatprep.subr.mxu0 0.0
        %834 = vmatpush1.msra.mxu0 0.0
        %835 = vmatprep.subr.mxu0 0.0
        %836 = vmatpush1.msra.mxu0 0.0
        %837 = vmatprep.subr.mxu0 0.0
        %838 = vmatpush1.msra.mxu0 0.0
        %839 = vmatprep.subr.mxu0 0.0
        %840 = vmatpush1.msra.mxu0 0.0
        %841 = vmatprep.subr.mxu0 0.0
        %842 = vmatpush1.msra.mxu0 0.0
        %843 = vmatprep.subr.mxu0 0.0
        %844 = vmatpush1.msra.mxu0 0.0
        %845 = vmatprep.subr.mxu0 0.0
        %846 = vmatpush1.msra.mxu0 %v810
        %847 = vmatprep.subr.mxu0 0.0
        %848 = vmatpush2.msra.mxu0 0.0
        %849 = vmatprep.subr.mxu0 0.0
        %850 = vmatpush2.msra.mxu0 0.0
        %851 = vmatprep.subr.mxu0 0.0
        %852 = vmatpush2.msra.mxu0 0.0
        %853 = vmatprep.subr.mxu0 0.0
        %854 = vmatpush2.msra.mxu0 0.0
        %855 = vmatprep.subr.mxu0 0.0
        %856 = vmatpush2.msra.mxu0 0.0
        %857 = vmatprep.subr.mxu0 0.0
        %858 = vmatpush2.msra.mxu0 0.0
        %859 = vmatprep.subr.mxu0 0.0
        %860 = vmatpush2.msra.mxu0 0.0
        %861 = vmatprep.subr.mxu0 0.0
        %862 = vmatpush2.msra.mxu0 0.0
        %863 = vmatprep.subr.mxu0 0.0
        %864 = vmatpush2.msra.mxu0 0.0
        %865 = vmatprep.subr.mxu0 0.0
        %866 = vmatpush2.msra.mxu0 0.0
        %867 = vmatprep.subr.mxu0 0.0
        %868 = vmatpush2.msra.mxu0 0.0
        %869 = vmatprep.subr.mxu0 0.0
        %870 = vmatpush2.msra.mxu0 0.0
        %871 = vmatprep.subr.mxu0 0.0
        %872 = vmatpush2.msra.mxu0 0.0
        %873 = vmatprep.subr.mxu0 0.0
        %874 = vmatpush2.msra.mxu0 0.0
        %875 = vmatprep.subr.mxu0 0.0
        %876 = vmatpush2.msra.mxu0 0.0
        %877 = vmatprep.subr.mxu0 0.0
        %878 = vmatpush2.msra.mxu0 0.0
        %879 = vmatprep.mubr.f32.mxu0 0.0
        %880 = vmatmul.mubr.f32.gmra.mxu0 %v813
        %v881 = vpop.f32.mrf.mxu0
        %v882 = vadd.f32 0.0, %v881
        %v883 = vpop.f32.mrf.mxu0
        %884 = vdwg.mxu0
        %v885 = vadd.f32 %v804, %v882
        %v886 = vrcp.pop %v808
        %v887 = vmul.f32 %v885, %v886
        %889 = vrot.lane.b32.xlu0 %v887, 16
        %v890 = vpop.permute.xlu0 %889
        %vm892 = vcmask 195712
        %893 = vst.msk [vmem:[#allocation2] sm:$0xff] %vm892, %v890
        %894 = vrot.lane.b32.xlu0 %v355, 104
        %v895 = vpop.permute.xlu0 %894
        %896 = vrot.lane.b32.xlu0 %v352, 72
        %v897 = vpop.permute.xlu0 %896
        %v898 = vsel %vm361, %v895, 0
        %v900 = vsel %vm361, %v897, 0
        %902 = vmatprep.subr.mxu0 0.0
        %903 = vmatpush1.xpose.msra.mxu0 0.0
        %904 = vmatprep.subr.mxu0 0.0
        %905 = vmatpush1.xpose.msra.mxu0 0.0
        %906 = vmatprep.subr.mxu0 0.0
        %907 = vmatpush1.xpose.msra.mxu0 0.0
        %908 = vmatprep.subr.mxu0 0.0
        %909 = vmatpush1.xpose.msra.mxu0 0.0
        %910 = vmatprep.subr.mxu0 0.0
        %911 = vmatpush1.xpose.msra.mxu0 0.0
        %912 = vmatprep.subr.mxu0 0.0
        %913 = vmatpush1.xpose.msra.mxu0 0.0
        %914 = vmatprep.subr.mxu0 0.0
        %915 = vmatpush1.xpose.msra.mxu0 0.0
        %916 = vmatprep.subr.mxu0 0.0
        %917 = vmatpush1.xpose.msra.mxu0 0.0
        %918 = vmatprep.subr.mxu0 0.0
        %919 = vmatpush1.xpose.msra.mxu0 0.0
        %920 = vmatprep.subr.mxu0 0.0
        %921 = vmatpush1.xpose.msra.mxu0 0.0
        %922 = vmatprep.subr.mxu0 0.0
        %923 = vmatpush1.xpose.msra.mxu0 0.0
        %924 = vmatprep.subr.mxu0 0.0
        %925 = vmatpush1.xpose.msra.mxu0 0.0
        %926 = vmatprep.subr.mxu0 0.0
        %927 = vmatpush1.xpose.msra.mxu0 0.0
        %928 = vmatprep.subr.mxu0 0.0
        %929 = vmatpush1.xpose.msra.mxu0 0.0
        %930 = vmatprep.subr.mxu0 0.0
        %931 = vmatpush1.xpose.msra.mxu0 0.0
        %932 = vmatprep.subr.mxu0 0.0
        %933 = vmatpush1.xpose.msra.mxu0 %v900
        %934 = vmatprep.subr.mxu0 0.0
        %935 = vmatpush2.xpose.msra.mxu0 0.0
        %936 = vmatprep.subr.mxu0 0.0
        %937 = vmatpush2.xpose.msra.mxu0 0.0
        %938 = vmatprep.subr.mxu0 0.0
        %939 = vmatpush2.xpose.msra.mxu0 0.0
        %940 = vmatprep.subr.mxu0 0.0
        %941 = vmatpush2.xpose.msra.mxu0 0.0
        %942 = vmatprep.subr.mxu0 0.0
        %943 = vmatpush2.xpose.msra.mxu0 0.0
        %944 = vmatprep.subr.mxu0 0.0
        %945 = vmatpush2.xpose.msra.mxu0 0.0
        %946 = vmatprep.subr.mxu0 0.0
        %947 = vmatpush2.xpose.msra.mxu0 0.0
        %948 = vmatprep.subr.mxu0 0.0
        %949 = vmatpush2.xpose.msra.mxu0 0.0
        %950 = vmatprep.subr.mxu0 0.0
        %951 = vmatpush2.xpose.msra.mxu0 0.0
        %952 = vmatprep.subr.mxu0 0.0
        %953 = vmatpush2.xpose.msra.mxu0 0.0
        %954 = vmatprep.subr.mxu0 0.0
        %955 = vmatpush2.xpose.msra.mxu0 0.0
        %956 = vmatprep.subr.mxu0 0.0
        %957 = vmatpush2.xpose.msra.mxu0 0.0
        %958 = vmatprep.subr.mxu0 0.0
        %959 = vmatpush2.xpose.msra.mxu0 0.0
        %960 = vmatprep.subr.mxu0 0.0
        %961 = vmatpush2.xpose.msra.mxu0 0.0
        %962 = vmatprep.subr.mxu0 0.0
        %963 = vmatpush2.xpose.msra.mxu0 0.0
        %964 = vmatprep.subr.mxu0 0.0
        %965 = vmatpush2.xpose.msra.mxu0 0.0
        %966 = vmatprep.mubr.f32.mxu0 0.0
        %967 = vmatmul.mubr.f32.gmra.mxu0 %v898
        %v968 = vpop.f32.mrf.mxu0
        %v969 = vadd.f32 0.0, %v968
        %v970 = vpop.f32.mrf.mxu0
        %971 = vdwg.mxu0
        %v972 = vsel %vm439, -1e+30, %v969
        %v973 = vsel %vm361, %v972, -inf
        %974 = vmax.xlane.f32.xlu0 %v973
        %v975 = vpop.xlane.xlu0 %974
        %v976 = vmax.f32 %v975, -1e+30
        %v977 = vsub.f32 -1e+30, %v976
        %v978 = vmul.f32 %v977, 1.442695
        %v979 = vpow.pop %v978
        %v980 = vsub.f32 %v972, %v976
        %v981 = vmul.f32 %v980, 1.442695
        %v982 = vpow.pop %v981
        %v983 = vmul.f32 %v979, 0.0
        %v984 = vsel %vm361, %v982, 0.0
        %985 = vadd.xlane.f32.xlu0 %v984
        %v986 = vpop.xlane.xlu0 %985
        %v987 = vadd.f32 %v983, %v986
        %988 = vrot.lane.b32.xlu0 %v352, 40
        %v989 = vpop.permute.xlu0 %988
        %v992 = vsel %vm361, %v982, 0
        %994 = vmatprep.subr.mxu0 0.0
        %995 = vmatpush1.msra.mxu0 0.0
        %996 = vmatprep.subr.mxu0 0.0
        %997 = vmatpush1.msra.mxu0 0.0
        %998 = vmatprep.subr.mxu0 0.0
        %999 = vmatpush1.msra.mxu0 0.0
        %1000 = vmatprep.subr.mxu0 0.0
        %1001 = vmatpush1.msra.mxu0 0.0
        %1002 = vmatprep.subr.mxu0 0.0
        %1003 = vmatpush1.msra.mxu0 0.0
        %1004 = vmatprep.subr.mxu0 0.0
        %1005 = vmatpush1.msra.mxu0 0.0
        %1006 = vmatprep.subr.mxu0 0.0
        %1007 = vmatpush1.msra.mxu0 0.0
        %1008 = vmatprep.subr.mxu0 0.0
        %1009 = vmatpush1.msra.mxu0 0.0
        %1010 = vmatprep.subr.mxu0 0.0
        %1011 = vmatpush1.msra.mxu0 0.0
        %1012 = vmatprep.subr.mxu0 0.0
        %1013 = vmatpush1.msra.mxu0 0.0
        %1014 = vmatprep.subr.mxu0 0.0
        %1015 = vmatpush1.msra.mxu0 0.0
        %1016 = vmatprep.subr.mxu0 0.0
        %1017 = vmatpush1.msra.mxu0 0.0
        %1018 = vmatprep.subr.mxu0 0.0
        %1019 = vmatpush1.msra.mxu0 0.0
        %1020 = vmatprep.subr.mxu0 0.0
        %1021 = vmatpush1.msra.mxu0 0.0
        %1022 = vmatprep.subr.mxu0 0.0
        %1023 = vmatpush1.msra.mxu0 0.0
        %1024 = vmatprep.subr.mxu0 0.0
        %1025 = vmatpush1.msra.mxu0 %v989
        %1026 = vmatprep.subr.mxu0 0.0
        %1027 = vmatpush2.msra.mxu0 0.0
        %1028 = vmatprep.subr.mxu0 0.0
        %1029 = vmatpush2.msra.mxu0 0.0
        %1030 = vmatprep.subr.mxu0 0.0
        %1031 = vmatpush2.msra.mxu0 0.0
        %1032 = vmatprep.subr.mxu0 0.0
        %1033 = vmatpush2.msra.mxu0 0.0
        %1034 = vmatprep.subr.mxu0 0.0
        %1035 = vmatpush2.msra.mxu0 0.0
        %1036 = vmatprep.subr.mxu0 0.0
        %1037 = vmatpush2.msra.mxu0 0.0
        %1038 = vmatprep.subr.mxu0 0.0
        %1039 = vmatpush2.msra.mxu0 0.0
        %1040 = vmatprep.subr.mxu0 0.0
        %1041 = vmatpush2.msra.mxu0 0.0
        %1042 = vmatprep.subr.mxu0 0.0
        %1043 = vmatpush2.msra.mxu0 0.0
        %1044 = vmatprep.subr.mxu0 0.0
        %1045 = vmatpush2.msra.mxu0 0.0
        %1046 = vmatprep.subr.mxu0 0.0
        %1047 = vmatpush2.msra.mxu0 0.0
        %1048 = vmatprep.subr.mxu0 0.0
        %1049 = vmatpush2.msra.mxu0 0.0
        %1050 = vmatprep.subr.mxu0 0.0
        %1051 = vmatpush2.msra.mxu0 0.0
        %1052 = vmatprep.subr.mxu0 0.0
        %1053 = vmatpush2.msra.mxu0 0.0
        %1054 = vmatprep.subr.mxu0 0.0
        %1055 = vmatpush2.msra.mxu0 0.0
        %1056 = vmatprep.subr.mxu0 0.0
        %1057 = vmatpush2.msra.mxu0 0.0
        %1058 = vmatprep.mubr.f32.mxu0 0.0
        %1059 = vmatmul.mubr.f32.gmra.mxu0 %v992
        %v1060 = vpop.f32.mrf.mxu0
        %v1061 = vadd.f32 0.0, %v1060
        %v1062 = vpop.f32.mrf.mxu0
        %1063 = vdwg.mxu0
        %v1064 = vadd.f32 %v983, %v1061
        %v1065 = vrcp.pop %v987
        %v1066 = vmul.f32 %v1064, %v1065
        %1068 = vrot.lane.b32.xlu0 %v1066, 24
        %v1069 = vpop.permute.xlu0 %1068
        %vm1071 = vcmask 261312
        %1072 = vst.msk [vmem:[#allocation2] sm:$0xff] %vm1071, %v1069
        %v1073 = vld [vmem:[#allocation2] sm:$0xff]
        %v1074 = vld [vmem:[#allocation8] sm:$0xff]
        %v1075 = vld [vmem:[#allocation8 + $0x8] sm:$0xff]
        %v1076 = vld [vmem:[#allocation8 + $0x10] sm:$0xff]
        %v1077 = vld [vmem:[#allocation8 + $0x18] sm:$0xff]
        %v1078 = vld [vmem:[%s4] sm:$0x1]
        %v1080 = vlaneseq
        %v1081 = vshrl.u32 %v1080, 7
        %v1082 = vsub.s32 0, %v1081
        %v1083 = vrot.slane %v1078, %v1082
        %v1086 = vsel %vm281, %v1073, 0
        %1088 = vmatprep.subr.mxu0 0.0
        %1089 = vmatpush1.msra.mxu0 0.0
        %1090 = vmatprep.subr.mxu0 0.0
        %1091 = vmatpush1.msra.mxu0 0.0
        %1092 = vmatprep.subr.mxu0 0.0
        %1093 = vmatpush1.msra.mxu0 0.0
        %1094 = vmatprep.subr.mxu0 0.0
        %1095 = vmatpush1.msra.mxu0 0.0
        %1096 = vmatprep.subr.mxu0 0.0
        %1097 = vmatpush1.msra.mxu0 0.0
        %1098 = vmatprep.subr.mxu0 0.0
        %1099 = vmatpush1.msra.mxu0 0.0
        %1100 = vmatprep.subr.mxu0 0.0
        %1101 = vmatpush1.msra.mxu0 0.0
        %1102 = vmatprep.subr.mxu0 0.0
        %1103 = vmatpush1.msra.mxu0 0.0
        %1104 = vmatprep.subr.mxu0 0.0
        %1105 = vmatpush1.msra.mxu0 0.0
        %1106 = vmatprep.subr.mxu0 0.0
        %1107 = vmatpush1.msra.mxu0 0.0
        %1108 = vmatprep.subr.mxu0 0.0
        %1109 = vmatpush1.msra.mxu0 0.0
        %1110 = vmatprep.subr.mxu0 0.0
        %1111 = vmatpush1.msra.mxu0 0.0
        %1112 = vmatprep.subr.mxu0 0.0
        %1113 = vmatpush1.msra.mxu0 %v1077
        %1114 = vmatprep.subr.mxu0 0.0
        %1115 = vmatpush1.msra.mxu0 %v1076
        %1116 = vmatprep.subr.mxu0 0.0
        %1117 = vmatpush1.msra.mxu0 %v1075
        %1118 = vmatprep.subr.mxu0 0.0
        %1119 = vmatpush1.msra.mxu0 %v1074
        %1120 = vmatprep.subr.mxu0 0.0
        %1121 = vmatpush2.msra.mxu0 0.0
        %1122 = vmatprep.subr.mxu0 0.0
        %1123 = vmatpush2.msra.mxu0 0.0
        %1124 = vmatprep.subr.mxu0 0.0
        %1125 = vmatpush2.msra.mxu0 0.0
        %1126 = vmatprep.subr.mxu0 0.0
        %1127 = vmatpush2.msra.mxu0 0.0
        %1128 = vmatprep.subr.mxu0 0.0
        %1129 = vmatpush2.msra.mxu0 0.0
        %1130 = vmatprep.subr.mxu0 0.0
        %1131 = vmatpush2.msra.mxu0 0.0
        %1132 = vmatprep.subr.mxu0 0.0
        %1133 = vmatpush2.msra.mxu0 0.0
        %1134 = vmatprep.subr.mxu0 0.0
        %1135 = vmatpush2.msra.mxu0 0.0
        %1136 = vmatprep.subr.mxu0 0.0
        %1137 = vmatpush2.msra.mxu0 0.0
        %1138 = vmatprep.subr.mxu0 0.0
        %1139 = vmatpush2.msra.mxu0 0.0
        %1140 = vmatprep.subr.mxu0 0.0
        %1141 = vmatpush2.msra.mxu0 0.0
        %1142 = vmatprep.subr.mxu0 0.0
        %1143 = vmatpush2.msra.mxu0 0.0
        %1144 = vmatprep.subr.mxu0 0.0
        %1145 = vmatpush2.msra.mxu0 0.0
        %1146 = vmatprep.subr.mxu0 0.0
        %1147 = vmatpush2.msra.mxu0 0.0
        %1148 = vmatprep.subr.mxu0 0.0
        %1149 = vmatpush2.msra.mxu0 0.0
        %1150 = vmatprep.subr.mxu0 0.0
        %1151 = vmatpush2.msra.mxu0 0.0
        %1152 = vmatprep.mubr.f32.mxu0 0.0
        %1153 = vmatmul.mubr.f32.gmra.mxu0 %v1086
        %v1154 = vpop.f32.mrf.mxu0
        %v1155 = vadd.f32 %v1083, %v1154
        %v1156 = vpop.f32.mrf.mxu0
        %1157 = vdwg.mxu0
        %1158 = vst.msk [vmem:[%s268] sm:$0xff] %vm281, %v1155
        %s1159 = sand.u32 %s141, 1
        %s1160 = scalar_lea.sflag [#allocation5], %s1159
        %s1161 = sand.u32 %s141, 1
        %s1162 = smul.addr %s1161, 8
        %s1163 = scalar_lea.vmem [#allocation9], %s1162
        // Predicated region
        $region53: #{tpu_custom_call.1} parent=39 // pred_check
          %p1164 = pneg %p151
        $region54: #{tpu_custom_call.1} parent=39 // pred_check_branch
          %1166 = sbr.rel (%p1164) target = $region56
        $region55: #{tpu_custom_call.1} parent=39 // pred_region
          %s1168 = ssub.s32 128, 128
          %1169 = vsyncadd %s1160, %s1168
          %s1170 = smul.addr %s23, 128
          %s1171 = scalar_lea.hbm %s5, %s1170
          %s1173 = sshll.u32 %s1163, 4
          %s1174 = int_to_ptr.vmem [resolvable:$true] %s1173
          %1176 = dma.vmem_to_hbm [thread:$0]  %s1174, 128, %s1171, %s1160
        $region56: #{tpu_custom_call.1} parent=39 // pred_fallthru
          _
      $region40: #{tpu_custom_call.1} parent=5 // pred_fallthru
        _
      %p1177 = scmp.le.s32.totalorder 2, %s18
      // Predicated region
      $region57: #{tpu_custom_call.1} parent=5 // pred_check
        %p1178 = pneg %p1177
      $region58: #{tpu_custom_call.1} parent=5 // pred_check_branch
        %1180 = sbr.rel (%p1178) target = $region60
      $region59: #{tpu_custom_call.1} parent=5 // pred_region
        %s1181 = ssub.s32 %s18, 2
        // Predicated region
        $region61: #{tpu_custom_call.1} parent=59 // pred_check
          %p1182 = pneg %p157
        $region62: #{tpu_custom_call.1} parent=59 // pred_check_branch
          %1184 = sbr.rel (%p1182) target = $region64
        $region63: #{tpu_custom_call.1} parent=59 // pred_region
          %s1185 = sand.u32 %s142, 1
          %s1186 = scalar_lea.sflag [#allocation5], %s1185
          %s1187 = sand.u32 %s142, 1
          %s1188 = smul.addr %s1187, 8
          %s1189 = scalar_lea.vmem [#allocation9], %s1188
          %1190 = dma.done %s1186, 128
        $region64: #{tpu_custom_call.1} parent=59 // pred_fallthru
          _
      $region60: #{tpu_custom_call.1} parent=5 // pred_fallthru
        _
    $region6: #{tpu_custom_call.1} parent=1 // loop_footer
      %s22 = sadd.s32 1, %s18
    $region7: #{tpu_custom_call.1} parent=1 // loop_footer_branch
      %17 = sbr.rel target = $region3
    $region8: #{tpu_custom_call.1} parent=1 // loop_exit
      _
    %1191 = vsyncpa [#allocation4], 1
    %s1192 = scalar_lea.sflag [#allocation4], 1
    %1193 = vsyncpa %s1192, 1
    %1194 = vsyncpa [#allocation7], 1
    %1195 = vsyncpa [#allocation5], 1
    %s1196 = scalar_lea.sflag [#allocation5], 1
    %1197 = vsyncpa %s1196, 1

</llo_original>
